<compile_context>
chip_gen: v7x
topology: tpu7x:2x2x1
jax: 0.10.0
libtpu: 0.0.40
codegen_flags: <defaults>
</compile_context>

<pallas_src>
import functools

import jax
import jax.numpy as jnp
from jax.experimental import pallas as pl
from jax.experimental.pallas import tpu as pltpu

BN_EPS = 1e-5
BN_BETA = 1e-4          # torch.nn.init.constant_(m.bias, 1e-4); weight (gamma) = 1
NUM_CONV_LAYERS = 3
HIDDEN_PAD = 128        # lane-dense hidden width (real hidden zero-padded to 128)
OUT_PAD = 128           # lane-dense class width (real out_channels zero-padded)


# --------------------------------- kernel ------------------------------------
def resgcn_kernel(hb0_ref, a_ref, p_ref,
                  wconv_ref, bconv_ref,
                  wfc_ref, bfc_ref, wcls_ref, bcls_ref,
                  out_ref,
                  h_ref, hw_ref, acc_ref, pool_ref, sum_ref, sq_ref,
                  *, n_real, out_channels, num_graphs):
    l = pl.program_id(0)            # conv layer                 (sequential)
    i = pl.program_id(1)            # row tile of A_hat          (carries h/pool/stats)
    k = pl.program_id(2)            # col tile of A_hat          (reduction, innermost)
    n_l = pl.num_programs(0)
    n_i = pl.num_programs(1)
    n_k = pl.num_programs(2)

    tm, tk = a_ref.shape
    inv_n = 1.0 / float(n_real)

    # ---- very first grid step: zero the grid-persistent accumulators --------
    @pl.when(jnp.logical_and(l == 0, jnp.logical_and(i == 0, k == 0)))
    def _init():
        pool_ref[...] = jnp.zeros_like(pool_ref)
        out_ref[...] = jnp.zeros_like(out_ref)

    kstart = pl.multiple_of(k * tk, tk)

    # ---- build hw[k] = bns_conv[l](h)[k-block] @ W_l, once per layer (i==0) --
    # One tk x 128 @ 128 x 128 matmul per k step: no full-height serial bubble
    # at layer boundaries, and it overlaps with the A-tile DMA pipeline.
    @pl.when(i == 0)
    def _build_hw_block():
        @pl.when(l == 0)
        def _layer0():
            # layer-0 normalized features were computed in the XLA wrapper.
            hw_ref[pl.ds(kstart, tk), :] = jnp.dot(
                hb0_ref[...], wconv_ref[0],
                preferred_element_type=jnp.float32).astype(hw_ref.dtype)

        @pl.when(l > 0)
        def _later():
            # bns_conv[l] from the sum/sumsq accumulated by the previous layer.
            m = sum_ref[...] * inv_n
            var = jnp.maximum(sq_ref[...] * inv_n - m * m, 0.0)
            hb = ((h_ref[pl.ds(kstart, tk), :].astype(jnp.float32) - m)
                  * jax.lax.rsqrt(var + BN_EPS) + BN_BETA)
            hw_ref[pl.ds(kstart, tk), :] = jnp.dot(
                hb, wconv_ref[0],
                preferred_element_type=jnp.float32).astype(hw_ref.dtype)

    # ---- tiled, pipelined aggregation: acc += A_hat[i, k] @ hw[k] (f32 acc) --
    @pl.when(k == 0)
    def _zero_acc():
        acc_ref[...] = jnp.zeros_like(acc_ref)

    acc_ref[...] += jnp.dot(a_ref[...], hw_ref[pl.ds(kstart, tk), :],
                            preferred_element_type=jnp.float32)

    # ---- last col tile: bias + relu, write rows, BN stats, pooling -----------
    @pl.when(k == n_k - 1)
    def _finish_rows():
        new_h = jnp.maximum(acc_ref[...] + bconv_ref[0], 0.0)
        row_ids = i * tm + jax.lax.broadcasted_iota(jnp.int32, (tm, 1), 0)
        new_h = new_h * (row_ids < n_real).astype(jnp.float32)   # keep pad rows 0
        istart = pl.multiple_of(i * tm, tm)
        h_ref[pl.ds(istart, tm), :] = new_h.astype(h_ref.dtype)

        # one-pass BN statistics for the NEXT layer, accumulated in f32 from the
        # f32 activations (before the bf16 store).
        # TODO(synk): switch to shifted sums / Welford if activations are badly
        # scaled (E[x^2] - E[x]^2 can cancel catastrophically).
        @pl.when(i == 0)
        def _zero_stats():
            sum_ref[...] = jnp.zeros_like(sum_ref)
            sq_ref[...] = jnp.zeros_like(sq_ref)

        sum_ref[...] += jnp.sum(new_h, axis=0, keepdims=True)
        sq_ref[...] += jnp.sum(new_h * new_h, axis=0, keepdims=True)

        @pl.when(l == n_l - 1)                  # global_add_pool, per row tile
        def _pool():
            pool_ref[...] += jnp.dot(p_ref[...].astype(jnp.float32), new_h,
                                     preferred_element_type=jnp.float32)

    # ---- very last grid step: FC head + log_softmax --------------------------
    last = jnp.logical_and(l == n_l - 1,
                           jnp.logical_and(i == n_i - 1, k == n_k - 1))

    @pl.when(last)
    def _head():
        inv_g = 1.0 / float(num_graphs)

        def bn_g(v):                            # BatchNorm1d over the graphs
            m = jnp.sum(v, axis=0, keepdims=True) * inv_g
            var = jnp.maximum(jnp.sum(v * v, axis=0, keepdims=True) * inv_g
                              - m * m, 0.0)
            return (v - m) * jax.lax.rsqrt(var + BN_EPS) + BN_BETA

        g = pool_ref[...]
        # one fc layer (num_fc_layers=2): bns_fc[0] -> lin -> relu
        g = jnp.maximum(
            jnp.dot(bn_g(g), wfc_ref[...], preferred_element_type=jnp.float32)
            + bfc_ref[...], 0.0)
        g = bn_g(g)                             # bn_hidden; dropout = 0
        logits = (jnp.dot(g, wcls_ref[...], preferred_element_type=jnp.float32)
                  + bcls_ref[...])
        # mask padded classes before log_softmax
        cmask = jax.lax.broadcasted_iota(jnp.int32, logits.shape, 1) < out_channels
        logits = jnp.where(cmask, logits, -1e30)
        mx = jnp.max(logits, axis=-1, keepdims=True)
        z = logits - mx
        lse = jnp.log(jnp.sum(jnp.exp(z), axis=-1, keepdims=True))
        out_ref[...] = z - lse


# ------------------------------- JAX wrapper ---------------------------------
def _round_up(v, m):
    return (v + m - 1) // m * m


def _bn_rows(v):
    """BatchNorm1d, training mode: biased batch stats, gamma=1, beta=1e-4."""
    m = jnp.mean(v, axis=0, keepdims=True)
    var = jnp.maximum(jnp.mean(v * v, axis=0, keepdims=True) - m * m, 0.0)
    return (v - m) * jax.lax.rsqrt(var + BN_EPS) + BN_BETA


def build_normalized_adjacency(edge_index, num_nodes, n_pad):
    """Dense A_hat = D^-1/2 (A+I) D^-1/2, exactly as GCNConv.norm, zero-padded."""
    row, col = edge_index[0], edge_index[1]
    ew = jnp.ones(row.shape[0], dtype=jnp.float32)
    loop = jnp.arange(num_nodes, dtype=row.dtype)
    row = jnp.concatenate([row, loop])
    col = jnp.concatenate([col, loop])
    ew = jnp.concatenate([ew, jnp.ones(num_nodes, dtype=jnp.float32)])
    deg = jnp.zeros((num_nodes,), jnp.float32).at[row].add(ew)
    dis = jnp.where(deg > 0, 1.0 / jnp.sqrt(deg), 0.0)
    norm = dis[row] * ew * dis[col]
    # aggregation at target (col) of source (row) features: out = A_hat @ x
    return jnp.zeros((n_pad, n_pad), jnp.float32).at[col, row].add(norm)


def build_pool_matrix(batch, num_graphs, num_nodes, n_pad):
    return (jnp.zeros((num_graphs, n_pad), jnp.float32)
            .at[batch, jnp.arange(num_nodes)].set(1.0))


def _pad2(w, rows, cols):
    out = jnp.zeros((rows, cols), jnp.float32)
    return out.at[:w.shape[0], :w.shape[1]].set(w.astype(jnp.float32))


@functools.partial(jax.jit, static_argnames=("num_graphs", "deep_pipeline"))
def resgcn_forward(x, edge_index, batch, params, num_graphs, deep_pipeline=True):
    n, in_c = x.shape
    hidden = params["w_feat"].shape[1]
    out_c = params["w_cls"].shape[1]

    # --- tiling (item 1): rectangular A tiles. tm keeps acc_ref at ~256 KiB,
    #     tk makes each grid step move ~1 MiB of A_hat so the per-step grid
    #     overhead is amortised.
    n128 = _round_up(n, 128)
    if n128 >= 1024:
        tm, tk = 512, 1024
        n_pad = _round_up(n, 1024)
    else:
        tm = tk = n128
        n_pad = n128
    n_i, n_k = n_pad // tm, n_pad // tk
    grid = (NUM_CONV_LAYERS, n_i, n_k)

    a_hat = build_normalized_adjacency(edge_index, n, n_pad).astype(jnp.bfloat16)
    # TODO(synk): stream A_hat as int8 (v5e/v6e) / fp8 (v7x) + scale and
    # dequantize to bf16 on the VPU, and skip all-zero (i, k) blocks via a
    # scalar-prefetched block list (PrefetchScalarGridSpec) -- both shrink the
    # dominant 3x N^2 HBM stream (review items 6/7).
    pool = build_pool_matrix(batch, num_graphs, n, n_pad).astype(jnp.bfloat16)

    # --- stage0 hoisted to XLA (item 3): bn_feat -> conv_feat (gfn matmul) ->
    #     relu -> bns_conv[0].  O(N*H) work; keeps x out of VMEM and removes the
    #     layer-0 serial bubble.  The MXU-heavy @ W_conv0 stays in the kernel.
    xf = x.astype(jnp.float32)
    h0 = jnp.maximum(_bn_rows(xf) @ params["w_feat"].astype(jnp.float32), 0.0)
    hb0 = _bn_rows(h0)                                   # bns_conv[0](h0)
    hb0 = jnp.zeros((n_pad, HIDDEN_PAD), jnp.float32).at[:n, :hidden].set(hb0)

    # lane-dense params: hidden / out_channels zero-padded to 128
    w_conv = jnp.stack([_pad2(params[f"w_conv{j}"], HIDDEN_PAD, HIDDEN_PAD)
                        for j in range(NUM_CONV_LAYERS)])
    b_conv = jnp.stack([_pad2(params[f"b_conv{j}"], 1, HIDDEN_PAD)
                        for j in range(NUM_CONV_LAYERS)])
    w_fc = _pad2(params["w_fc"], HIDDEN_PAD, HIDDEN_PAD)
    b_fc = _pad2(params["b_fc"], 1, HIDDEN_PAD)
    w_cls = _pad2(params["w_cls"], HIDDEN_PAD, OUT_PAD)
    b_cls = _pad2(params["b_cls"], 1, OUT_PAD)

    # --- BlockSpecs -----------------------------------------------------------
    const = lambda l, i, k: (0, 0)                      # VMEM resident
    per_layer = lambda l, i, k: (l, 0, 0)               # re-DMA'd once per layer

    def hb0_map(l, i, k):
        # only needed while building layer-0's hw (l==0, i==0); park on block 0
        # afterwards so it is not re-DMA'd every step.
        return (jnp.where(jnp.logical_and(l == 0, i == 0), k, 0), 0)

    a_idx = lambda l, i, k: (i, k)
    if deep_pipeline:
        # item 9: 3-deep prefetch keeps A-tile DMAs in flight across the
        # hw-build and row-finalize steps.
        a_spec = pl.BlockSpec((tm, tk), a_idx, pipeline_mode=pl.Buffered(3))
    else:
        a_spec = pl.BlockSpec((tm, tk), a_idx)

    in_specs = [
        pl.BlockSpec((tk, HIDDEN_PAD), hb0_map),                 # hb0 (layer 0)
        a_spec,                                                  # A_hat tiles
        pl.BlockSpec((num_graphs, tm), lambda l, i, k: (0, i)),  # pooling rows
        pl.BlockSpec((1, HIDDEN_PAD, HIDDEN_PAD), per_layer),    # w_conv[l]
        pl.BlockSpec((1, 1, HIDDEN_PAD), per_layer),             # b_conv[l]
        pl.BlockSpec((HIDDEN_PAD, HIDDEN_PAD), const),           # w_fc
        pl.BlockSpec((1, HIDDEN_PAD), const),                    # b_fc
        pl.BlockSpec((HIDDEN_PAD, OUT_PAD), const),              # w_cls
        pl.BlockSpec((1, OUT_PAD), const),                       # b_cls
    ]
    out_spec = pl.BlockSpec((num_graphs, OUT_PAD), const)

    scratch_shapes = [
        pltpu.VMEM((n_pad, HIDDEN_PAD), jnp.bfloat16),      # h  (prev layer out)
        pltpu.VMEM((n_pad, HIDDEN_PAD), jnp.bfloat16),      # hw (bn(h) @ W_l)
        pltpu.VMEM((tm, HIDDEN_PAD), jnp.float32),          # aggregation acc
        pltpu.VMEM((num_graphs, HIDDEN_PAD), jnp.float32),  # pooled graph feats
        pltpu.VMEM((1, HIDDEN_PAD), jnp.float32),           # BN sum   (next layer)
        pltpu.VMEM((1, HIDDEN_PAD), jnp.float32),           # BN sumsq (next layer)
    ]

    # --- generation-aware VMEM budget (item 2), (8,128)/(16,128)-tiling aware.
    g8, g16 = _round_up(num_graphs, 8), _round_up(num_graphs, 16)
    weight_bytes = 4 * (NUM_CONV_LAYERS * (HIDDEN_PAD * HIDDEN_PAD + 8 * HIDDEN_PAD)
                        + HIDDEN_PAD * HIDDEN_PAD + 8 * HIDDEN_PAD
                        + HIDDEN_PAD * OUT_PAD + 8 * OUT_PAD)
    n_abuf = 3 if deep_pipeline else 2
    io_bytes = (n_abuf * tm * tk * 2              # A_hat tiles (bf16)
                + 2 * tk * HIDDEN_PAD * 4         # hb0 tiles (f32)
                + 2 * g16 * tm * 2                # pooling tiles (bf16)
                + 2 * weight_bytes                # weights (assume 2 buffers)
                + 2 * g8 * OUT_PAD * 4)           # output block
    scratch_bytes = (2 * n_pad * HIDDEN_PAD * 2   # h + hw (bf16)
                     + tm * HIDDEN_PAD * 4
                     + g8 * HIDDEN_PAD * 4
                     + 2 * 8 * HIDDEN_PAD * 4)
    try:
        vmem_cap = int(pltpu.get_tpu_info().vmem_capacity_bytes)
    except Exception:
        vmem_cap = 64 << 20                       # v7x per-TensorCore capacity
    vmem_limit = min(int((io_bytes + scratch_bytes) * 1.25) + (2 << 20),
                     (vmem_cap * 9) // 10)
    # TODO(synk): for graphs too large for h/hw to stay VMEM-resident, stream
    # h/hw from HBM, and on v7x mark the row-tile axis "parallel" with per-core
    # pool/BN-stat partials + combine (review items 5/8).

    flops = (NUM_CONV_LAYERS * 2 * n_pad * n_pad * HIDDEN_PAD          # aggregation
             + NUM_CONV_LAYERS * 2 * n_pad * HIDDEN_PAD * HIDDEN_PAD   # hw builds
             + 2 * num_graphs * n_pad * HIDDEN_PAD                     # pooling
             + 4 * num_graphs * HIDDEN_PAD * HIDDEN_PAD)               # fc head
    bytes_accessed = (NUM_CONV_LAYERS * n_pad * n_pad * 2              # A_hat
                      + n_pad * HIDDEN_PAD * 4                         # hb0
                      + NUM_CONV_LAYERS * num_graphs * n_pad * 2       # pooling
                      + weight_bytes + num_graphs * OUT_PAD * 4)

    kernel = functools.partial(resgcn_kernel, n_real=n, out_channels=out_c,
                               num_graphs=num_graphs)
    out = pl.pallas_call(
        kernel,
        out_shape=jax.ShapeDtypeStruct((num_graphs, OUT_PAD), jnp.float32),
        grid=grid,
        in_specs=in_specs,
        out_specs=out_spec,
        scratch_shapes=scratch_shapes,
        compiler_params=pltpu.CompilerParams(
            # every axis carries sequential state (layer recurrence, BN stats,
            # acc / pool accumulation) -> all 'arbitrary' on single-TC chips.
            dimension_semantics=("arbitrary", "arbitrary", "arbitrary"),
            vmem_limit_bytes=vmem_limit),
        cost_estimate=pl.CostEstimate(
            flops=int(flops),
            transcendentals=int(num_graphs * OUT_PAD
                                + (NUM_CONV_LAYERS + 2) * HIDDEN_PAD),
            bytes_accessed=int(bytes_accessed)),
    )(hb0, a_hat, pool, w_conv, b_conv, w_fc, b_fc, w_cls, b_cls)
    return out[:, :out_c]


def init_params(key, in_channels, hidden, out_channels):
    ks = jax.random.split(key, 8)

    def w(k, shape, scale=0.1):
        return (scale * jax.random.normal(k, shape)).astype(jnp.float32)

    return {
        "w_feat": w(ks[0], (in_channels, hidden)),
        "w_conv0": w(ks[1], (hidden, hidden)),
        "b_conv0": w(ks[2], (1, hidden), 0.01),
        "w_conv1": w(ks[3], (hidden, hidden)),
        "b_conv1": jnp.zeros((1, hidden), jnp.float32),
        "w_conv2": w(ks[4], (hidden, hidden)),
        "b_conv2": jnp.zeros((1, hidden), jnp.float32),
        "w_fc": w(ks[5], (hidden, hidden)),
        "b_fc": w(ks[6], (1, hidden), 0.01),
        "w_cls": w(ks[7], (hidden, out_channels)),
        "b_cls": jnp.zeros((1, out_channels), jnp.float32),
    }
    # TODO(synk): proj_head / forward_cl path and other res_branch variants
    # (BNReLUConv, ConvReLUBN, resnet), collapse/use_xg/gating are not exercised
    # by the default forward (BNConvReLU) and are not implemented.


def reference_forward(x, edge_index, batch, params, num_graphs):
    """Pure-JAX f32 reference of the same forward (for a tolerance check)."""
    n = x.shape[0]
    a = build_normalized_adjacency(edge_index, n, n)
    p = build_pool_matrix(batch, num_graphs, n, n)
    h = jnp.maximum(_bn_rows(x.astype(jnp.float32)) @ params["w_feat"], 0.0)
    for i in range(NUM_CONV_LAYERS):
        hw = _bn_rows(h) @ params[f"w_conv{i}"]
        h = jnp.maximum(a @ hw + params[f"b_conv{i}"], 0.0)
    g = p @ h
    g = jnp.maximum(_bn_rows(g) @ params["w_fc"] + params["b_fc"], 0.0)
    logits = _bn_rows(g) @ params["w_cls"] + params["b_cls"]
    return jax.nn.log_softmax(logits, axis=-1)


if __name__ == "__main__":
    IN_CHANNELS = 4
    HIDDEN = 32
    OUT_CHANNELS = 4
    NODES_PER_GRAPH = 8
    NUM_GRAPHS = 2
    N = NODES_PER_GRAPH * NUM_GRAPHS

    key = jax.random.PRNGKey(0)
    kx, kp = jax.random.split(key)

    x = jax.random.normal(kx, (N, IN_CHANNELS), dtype=jnp.float32)

    # two ring graphs of 8 nodes each, both edge directions
    rows, cols = [], []
    for g in range(NUM_GRAPHS):
        off = g * NODES_PER_GRAPH
        for i in range(NODES_PER_GRAPH):
            a, b = off + i, off + (i + 1) % NODES_PER_GRAPH
            rows += [a, b]
            cols += [b, a]
    edge_index = jnp.array([rows, cols], dtype=jnp.int32)
    batch = jnp.repeat(jnp.arange(NUM_GRAPHS, dtype=jnp.int32), NODES_PER_GRAPH)

    params = init_params(kp, IN_CHANNELS, HIDDEN, OUT_CHANNELS)

    fwd = functools.partial(resgcn_forward, x, edge_index, batch, params,
                            num_graphs=NUM_GRAPHS)
    try:
        out = jax.block_until_ready(fwd(deep_pipeline=True))
    except Exception:
        # graceful fallback if this JAX build rejects BlockSpec(pipeline_mode=
        # pl.Buffered(3)) -- identical numerics, default 2-deep pipelining.
        out = jax.block_until_ready(fwd(deep_pipeline=False))

    assert out.shape == (NUM_GRAPHS, OUT_CHANNELS)
    assert bool(jnp.all(jnp.isfinite(out)))
    # log_softmax rows should sum (in prob space) to ~1
    assert bool(jnp.allclose(jnp.sum(jnp.exp(out), axis=-1), 1.0, atol=1e-4))
    # compare against the f32 pure-JAX reference (bf16 A_hat / h / hw tolerance)
    ref = reference_forward(x, edge_index, batch, params, NUM_GRAPHS)
    assert bool(jnp.allclose(out, ref, atol=0.1)), float(jnp.max(jnp.abs(out - ref)))
    print("KERNEL_OK")
</pallas_src>

<mosaic_0001>
module attributes {stable_mosaic.version = 11 : i64} {
  func.func private @main(%arg0: i32) attributes {dimension_semantics = [#tpu.dimension_semantics<core_parallel>], iteration_bounds = array<i64: 2>, tpu.core_type = #tpu.core_type<sc_scalar_subcore>, window_params = []} {
    return
  }
}

module attributes {stable_mosaic.version = 11 : i64} {
  func.func private @main(%arg0: i32) attributes {dimension_semantics = [#tpu.dimension_semantics<core_parallel>], iteration_bounds = array<i64: 2>, tpu.core_type = #tpu.core_type<sc_scalar_subcore>, window_params = []} {
    return
  }
}

module attributes {stable_mosaic.version = 11 : i64} {
  func.func @resgcn_kernel(%arg0: i32, %arg1: i32, %arg2: i32, %arg3: memref<128x128xf32, #tpu.memory_space<vmem>>, %arg4: memref<128x128xbf16, #tpu.memory_space<vmem>>, %arg5: memref<2x128xbf16, #tpu.memory_space<vmem>>, %arg6: memref<1x128x128xf32, #tpu.memory_space<vmem>>, %arg7: memref<1x1x128xf32, #tpu.memory_space<vmem>>, %arg8: memref<128x128xf32, #tpu.memory_space<vmem>>, %arg9: memref<1x128xf32, #tpu.memory_space<vmem>>, %arg10: memref<128x128xf32, #tpu.memory_space<vmem>>, %arg11: memref<1x128xf32, #tpu.memory_space<vmem>>, %arg12: memref<2x128xf32, #tpu.memory_space<vmem>>, %arg13: memref<128x128xbf16, #tpu.memory_space<vmem>>, %arg14: memref<128x128xbf16, #tpu.memory_space<vmem>>, %arg15: memref<128x128xf32, #tpu.memory_space<vmem>>, %arg16: memref<2x128xf32, #tpu.memory_space<vmem>>, %arg17: memref<1x128xf32, #tpu.memory_space<vmem>>, %arg18: memref<1x128xf32, #tpu.memory_space<vmem>>) attributes {dimension_semantics = [#tpu.dimension_semantics<arbitrary>, #tpu.dimension_semantics<arbitrary>, #tpu.dimension_semantics<arbitrary>], iteration_bounds = array<i64: 3, 1, 1>, scalar_prefetch = 0 : i64, scratch_operands = 6 : i64, tpu.core_type = #tpu.core_type<tc>, window_params = [{transform_indices = @transform_0, window_bounds = array<i64: 128, 128>}, {transform_indices = @transform_1, window_bounds = array<i64: 128, 128>}, {transform_indices = @transform_2, window_bounds = array<i64: 2, 128>}, {transform_indices = @transform_3, window_bounds = array<i64: 1, 128, 128>}, {transform_indices = @transform_4, window_bounds = array<i64: 1, 1, 128>}, {pipeline_mode = #tpu.pipeline_mode<synchronous>, transform_indices = @transform_5, window_bounds = array<i64: 128, 128>}, {pipeline_mode = #tpu.pipeline_mode<synchronous>, transform_indices = @transform_6, window_bounds = array<i64: 1, 128>}, {pipeline_mode = #tpu.pipeline_mode<synchronous>, transform_indices = @transform_7, window_bounds = array<i64: 128, 128>}, {pipeline_mode = #tpu.pipeline_mode<synchronous>, transform_indices = @transform_8, window_bounds = array<i64: 1, 128>}, {pipeline_mode = #tpu.pipeline_mode<synchronous>, transform_indices = @transform_9, window_bounds = array<i64: 2, 128>}]} {
    %c0_i32 = arith.constant 0 : i32
    %0 = arith.cmpi eq, %arg0, %c0_i32 : i32
    %c0_i32_0 = arith.constant 0 : i32
    %1 = arith.cmpi eq, %arg1, %c0_i32_0 : i32
    %c0_i32_1 = arith.constant 0 : i32
    %2 = arith.cmpi eq, %arg2, %c0_i32_1 : i32
    %3 = arith.andi %1, %2 : i1
    %4 = arith.andi %0, %3 : i1
    %5 = arith.extui %4 : i1 to i32
    %c0_i32_2 = arith.constant 0 : i32
    %6 = arith.cmpi ne, %5, %c0_i32_2 : i32
    scf.if %6 {
      %cst_18 = arith.constant 0.000000e+00 : f32
      %32 = vector.broadcast %cst_18 : f32 to vector<2x128xf32>
      %c0_19 = arith.constant 0 : index
      %c0_20 = arith.constant 0 : index
      %33 = vector.load %arg16[%c0_19, %c0_20] : memref<2x128xf32, #tpu.memory_space<vmem>>, vector<2x128xf32>
      tpu.vector_store %arg16[%c0_19, %c0_20], %32 {strides = array<i32>} : memref<2x128xf32, #tpu.memory_space<vmem>>, vector<2x128xf32>,
      %cst_21 = arith.constant 0.000000e+00 : f32
      %34 = vector.broadcast %cst_21 : f32 to vector<2x128xf32>
      %c0_22 = arith.constant 0 : index
      %c0_23 = arith.constant 0 : index
      %35 = vector.load %arg12[%c0_22, %c0_23] : memref<2x128xf32, #tpu.memory_space<vmem>>, vector<2x128xf32>
      tpu.vector_store %arg12[%c0_22, %c0_23], %34 {strides = array<i32>} : memref<2x128xf32, #tpu.memory_space<vmem>>, vector<2x128xf32>,
    } else {
    }
    %c128_i32 = arith.constant 128 : i32
    %7 = arith.muli %arg2, %c128_i32 : i32
    %8 = tpu.assume_multiple %7, 128 : i32
    %c0_i32_3 = arith.constant 0 : i32
    %9 = arith.cmpi eq, %arg1, %c0_i32_3 : i32
    %10 = arith.extui %9 : i1 to i32
    %c0_i32_4 = arith.constant 0 : i32
    %11 = arith.cmpi ne, %10, %c0_i32_4 : i32
    scf.if %11 {
      %c0_i32_18 = arith.constant 0 : i32
      %32 = arith.cmpi eq, %arg0, %c0_i32_18 : i32
      %33 = arith.extui %32 : i1 to i32
      %c0_i32_19 = arith.constant 0 : i32
      %34 = arith.cmpi ne, %33, %c0_i32_19 : i32
      scf.if %34 {
        %c0_22 = arith.constant 0 : index
        %c0_23 = arith.constant 0 : index
        %38 = vector.load %arg3[%c0_22, %c0_23] : memref<128x128xf32, #tpu.memory_space<vmem>>, vector<128x128xf32>
        %c0_24 = arith.constant 0 : index
        %c0_25 = arith.constant 0 : index
        %c0_26 = arith.constant 0 : index
        %39 = vector.load %arg6[%c0_24, %c0_25, %c0_26] : memref<1x128x128xf32, #tpu.memory_space<vmem>>, vector<1x128x128xf32>
        %40 = vector.shape_cast %39 : vector<1x128x128xf32> to vector<128x128xf32>
        %cst_27 = arith.constant dense<0.000000e+00> : vector<128x128xf32>
        %41 = tpu.matmul %38, %40, %cst_27 {dimension_numbers = #tpu.dot_dimension_numbers<[1], [0], [0], [1], [0, 0, 1, 1], [], []>} : vector<128x128xf32>, vector<128x128xf32>, vector<128x128xf32> -> vector<128x128xf32>
        %42 = arith.truncf %41 : vector<128x128xf32> to vector<128x128xbf16>
        %43 = arith.index_cast %8 : i32 to index
        %c0_28 = arith.constant 0 : index
        %44 = vector.load %arg14[%43, %c0_28] : memref<128x128xbf16, #tpu.memory_space<vmem>>, vector<128x128xbf16>
        tpu.vector_store %arg14[%43, %c0_28], %42 {strides = array<i32>} : memref<128x128xbf16, #tpu.memory_space<vmem>>, vector<128x128xbf16>,
      } else {
      }
      %c0_i32_20 = arith.constant 0 : i32
      %35 = arith.cmpi sgt, %arg0, %c0_i32_20 : i32
      %36 = arith.extui %35 : i1 to i32
      %c0_i32_21 = arith.constant 0 : i32
      %37 = arith.cmpi ne, %36, %c0_i32_21 : i32
      scf.if %37 {
        %c0_22 = arith.constant 0 : index
        %c0_23 = arith.constant 0 : index
        %38 = vector.load %arg17[%c0_22, %c0_23] : memref<1x128xf32, #tpu.memory_space<vmem>>, vector<1x128xf32>
        %cst_24 = arith.constant 6.250000e-02 : f32
        %39 = vector.broadcast %cst_24 : f32 to vector<1x128xf32>
        %40 = arith.mulf %38, %39 : vector<1x128xf32>
        %c0_25 = arith.constant 0 : index
        %c0_26 = arith.constant 0 : index
        %41 = vector.load %arg18[%c0_25, %c0_26] : memref<1x128xf32, #tpu.memory_space<vmem>>, vector<1x128xf32>
        %cst_27 = arith.constant 6.250000e-02 : f32
        %42 = vector.broadcast %cst_27 : f32 to vector<1x128xf32>
        %43 = arith.mulf %41, %42 : vector<1x128xf32>
        %44 = arith.mulf %40, %40 : vector<1x128xf32>
        %45 = arith.subf %43, %44 : vector<1x128xf32>
        %cst_28 = arith.constant 0.000000e+00 : f32
        %46 = vector.broadcast %cst_28 : f32 to vector<1x128xf32>
        %47 = arith.maximumf %45, %46 : vector<1x128xf32>
        %48 = arith.index_cast %8 : i32 to index
        %c0_29 = arith.constant 0 : index
        %49 = vector.load %arg13[%48, %c0_29] : memref<128x128xbf16, #tpu.memory_space<vmem>>, vector<128x128xbf16>
        %50 = arith.extf %49 : vector<128x128xbf16> to vector<128x128xf32>
        %51 = vector.broadcast %40 : vector<1x128xf32> to vector<128x128xf32>
        %52 = arith.subf %50, %51 : vector<128x128xf32>
        %cst_30 = arith.constant 9.99999974E-6 : f32
        %53 = vector.broadcast %cst_30 : f32 to vector<1x128xf32>
        %54 = arith.addf %47, %53 : vector<1x128xf32>
        %55 = math.rsqrt %54 : vector<1x128xf32>
        %56 = vector.broadcast %55 : vector<1x128xf32> to vector<128x128xf32>
        %57 = arith.mulf %52, %56 : vector<128x128xf32>
        %cst_31 = arith.constant 9.99999974E-5 : f32
        %58 = vector.broadcast %cst_31 : f32 to vector<128x128xf32>
        %59 = arith.addf %57, %58 : vector<128x128xf32>
        %c0_32 = arith.constant 0 : index
        %c0_33 = arith.constant 0 : index
        %c0_34 = arith.constant 0 : index
        %60 = vector.load %arg6[%c0_32, %c0_33, %c0_34] : memref<1x128x128xf32, #tpu.memory_space<vmem>>, vector<1x128x128xf32>
        %61 = vector.shape_cast %60 : vector<1x128x128xf32> to vector<128x128xf32>
        %cst_35 = arith.constant dense<0.000000e+00> : vector<128x128xf32>
        %62 = tpu.matmul %59, %61, %cst_35 {dimension_numbers = #tpu.dot_dimension_numbers<[1], [0], [0], [1], [0, 0, 1, 1], [], []>} : vector<128x128xf32>, vector<128x128xf32>, vector<128x128xf32> -> vector<128x128xf32>
        %63 = arith.truncf %62 : vector<128x128xf32> to vector<128x128xbf16>
        %64 = arith.index_cast %8 : i32 to index
        %c0_36 = arith.constant 0 : index
        %65 = vector.load %arg14[%64, %c0_36] : memref<128x128xbf16, #tpu.memory_space<vmem>>, vector<128x128xbf16>
        tpu.vector_store %arg14[%64, %c0_36], %63 {strides = array<i32>} : memref<128x128xbf16, #tpu.memory_space<vmem>>, vector<128x128xbf16>,
      } else {
      }
    } else {
    }
    %c0_i32_5 = arith.constant 0 : i32
    %12 = arith.cmpi eq, %arg2, %c0_i32_5 : i32
    %13 = arith.extui %12 : i1 to i32
    %c0_i32_6 = arith.constant 0 : i32
    %14 = arith.cmpi ne, %13, %c0_i32_6 : i32
    scf.if %14 {
      %cst_18 = arith.constant 0.000000e+00 : f32
      %32 = vector.broadcast %cst_18 : f32 to vector<128x128xf32>
      %c0_19 = arith.constant 0 : index
      %c0_20 = arith.constant 0 : index
      %33 = vector.load %arg15[%c0_19, %c0_20] : memref<128x128xf32, #tpu.memory_space<vmem>>, vector<128x128xf32>
      tpu.vector_store %arg15[%c0_19, %c0_20], %32 {strides = array<i32>} : memref<128x128xf32, #tpu.memory_space<vmem>>, vector<128x128xf32>,
    } else {
    }
    %c0 = arith.constant 0 : index
    %c0_7 = arith.constant 0 : index
    %15 = vector.load %arg15[%c0, %c0_7] : memref<128x128xf32, #tpu.memory_space<vmem>>, vector<128x128xf32>
    %c0_8 = arith.constant 0 : index
    %c0_9 = arith.constant 0 : index
    %16 = vector.load %arg4[%c0_8, %c0_9] : memref<128x128xbf16, #tpu.memory_space<vmem>>, vector<128x128xbf16>
    %17 = arith.index_cast %8 : i32 to index
    %c0_10 = arith.constant 0 : index
    %18 = vector.load %arg14[%17, %c0_10] : memref<128x128xbf16, #tpu.memory_space<vmem>>, vector<128x128xbf16>
    %cst = arith.constant dense<0.000000e+00> : vector<128x128xf32>
    %19 = tpu.matmul %16, %18, %cst {dimension_numbers = #tpu.dot_dimension_numbers<[1], [0], [0], [1], [0, 0, 1, 1], [], []>} : vector<128x128xbf16>, vector<128x128xbf16>, vector<128x128xf32> -> vector<128x128xf32>
    %20 = arith.addf %15, %19 : vector<128x128xf32>
    %c0_11 = arith.constant 0 : index
    %c0_12 = arith.constant 0 : index
    %21 = vector.load %arg15[%c0_11, %c0_12] : memref<128x128xf32, #tpu.memory_space<vmem>>, vector<128x128xf32>
    tpu.vector_store %arg15[%c0_11, %c0_12], %20 {strides = array<i32>} : memref<128x128xf32, #tpu.memory_space<vmem>>, vector<128x128xf32>,
    %c0_i32_13 = arith.constant 0 : i32
    %22 = arith.cmpi eq, %arg2, %c0_i32_13 : i32
    %23 = arith.extui %22 : i1 to i32
    %c0_i32_14 = arith.constant 0 : i32
    %24 = arith.cmpi ne, %23, %c0_i32_14 : i32
    scf.if %24 {
      %c0_18 = arith.constant 0 : index
      %c0_19 = arith.constant 0 : index
      %32 = vector.load %arg15[%c0_18, %c0_19] : memref<128x128xf32, #tpu.memory_space<vmem>>, vector<128x128xf32>
      %c0_20 = arith.constant 0 : index
      %c0_21 = arith.constant 0 : index
      %c0_22 = arith.constant 0 : index
      %33 = vector.load %arg7[%c0_20, %c0_21, %c0_22] : memref<1x1x128xf32, #tpu.memory_space<vmem>>, vector<1x1x128xf32>
      %34 = vector.shape_cast %33 : vector<1x1x128xf32> to vector<1x128xf32>
      %35 = vector.broadcast %34 : vector<1x128xf32> to vector<128x128xf32>
      %36 = arith.addf %32, %35 : vector<128x128xf32>
      %cst_23 = arith.constant 0.000000e+00 : f32
      %37 = vector.broadcast %cst_23 : f32 to vector<128x128xf32>
      %38 = arith.maximumf %36, %37 : vector<128x128xf32>
      %c128_i32_24 = arith.constant 128 : i32
      %39 = arith.muli %arg1, %c128_i32_24 : i32
      %40 = tpu.iota {dimensions = array<i32: 0>} : vector<128x1xi32>
      %41 = vector.broadcast %39 : i32 to vector<128x1xi32>
      %42 = arith.addi %41, %40 : vector<128x1xi32>
      %c16_i32 = arith.constant 16 : i32
      %43 = vector.broadcast %c16_i32 : i32 to vector<128x1xi32>
      %44 = arith.cmpi slt, %42, %43 : vector<128x1xi32>
      %45 = arith.extui %44 : vector<128x1xi1> to vector<128x1xi32>
      %46 = arith.sitofp %45 : vector<128x1xi32> to vector<128x1xf32>
      %47 = vector.broadcast %46 : vector<128x1xf32> to vector<128x128xf32>
      %48 = arith.mulf %38, %47 : vector<128x128xf32>
      %c128_i32_25 = arith.constant 128 : i32
      %49 = arith.muli %arg1, %c128_i32_25 : i32
      %50 = tpu.assume_multiple %49, 128 : i32
      %51 = arith.truncf %48 : vector<128x128xf32> to vector<128x128xbf16>
      %52 = arith.index_cast %50 : i32 to index
      %c0_26 = arith.constant 0 : index
      %53 = vector.load %arg13[%52, %c0_26] : memref<128x128xbf16, #tpu.memory_space<vmem>>, vector<128x128xbf16>
      tpu.vector_store %arg13[%52, %c0_26], %51 {strides = array<i32>} : memref<128x128xbf16, #tpu.memory_space<vmem>>, vector<128x128xbf16>,
      %c0_i32_27 = arith.constant 0 : i32
      %54 = arith.cmpi eq, %arg1, %c0_i32_27 : i32
      %55 = arith.extui %54 : i1 to i32
      %c0_i32_28 = arith.constant 0 : i32
      %56 = arith.cmpi ne, %55, %c0_i32_28 : i32
      scf.if %56 {
        %cst_41 = arith.constant 0.000000e+00 : f32
        %71 = vector.broadcast %cst_41 : f32 to vector<1x128xf32>
        %c0_42 = arith.constant 0 : index
        %c0_43 = arith.constant 0 : index
        %72 = vector.load %arg17[%c0_42, %c0_43] : memref<1x128xf32, #tpu.memory_space<vmem>>, vector<1x128xf32>
        tpu.vector_store %arg17[%c0_42, %c0_43], %71 {strides = array<i32>} : memref<1x128xf32, #tpu.memory_space<vmem>>, vector<1x128xf32>,
        %cst_44 = arith.constant 0.000000e+00 : f32
        %73 = vector.broadcast %cst_44 : f32 to vector<1x128xf32>
        %c0_45 = arith.constant 0 : index
        %c0_46 = arith.constant 0 : index
        %74 = vector.load %arg18[%c0_45, %c0_46] : memref<1x128xf32, #tpu.memory_space<vmem>>, vector<1x128xf32>
        tpu.vector_store %arg18[%c0_45, %c0_46], %73 {strides = array<i32>} : memref<1x128xf32, #tpu.memory_space<vmem>>, vector<1x128xf32>,
      } else {
      }
      %c0_29 = arith.constant 0 : index
      %c0_30 = arith.constant 0 : index
      %57 = vector.load %arg17[%c0_29, %c0_30] : memref<1x128xf32, #tpu.memory_space<vmem>>, vector<1x128xf32>
      %cst_31 = arith.constant dense<0.000000e+00> : vector<128xf32>
      %58 = vector.multi_reduction <add>, %48, %cst_31 [0] : vector<128x128xf32> to vector<128xf32>
      %59 = vector.shape_cast %58 : vector<128xf32> to vector<1x128xf32>
      %60 = arith.addf %57, %59 : vector<1x128xf32>
      %c0_32 = arith.constant 0 : index
      %c0_33 = arith.constant 0 : index
      %61 = vector.load %arg17[%c0_32, %c0_33] : memref<1x128xf32, #tpu.memory_space<vmem>>, vector<1x128xf32>
      tpu.vector_store %arg17[%c0_32, %c0_33], %60 {strides = array<i32>} : memref<1x128xf32, #tpu.memory_space<vmem>>, vector<1x128xf32>,
      %c0_34 = arith.constant 0 : index
      %c0_35 = arith.constant 0 : index
      %62 = vector.load %arg18[%c0_34, %c0_35] : memref<1x128xf32, #tpu.memory_space<vmem>>, vector<1x128xf32>
      %63 = arith.mulf %48, %48 : vector<128x128xf32>
      %cst_36 = arith.constant dense<0.000000e+00> : vector<128xf32>
      %64 = vector.multi_reduction <add>, %63, %cst_36 [0] : vector<128x128xf32> to vector<128xf32>
      %65 = vector.shape_cast %64 : vector<128xf32> to vector<1x128xf32>
      %66 = arith.addf %62, %65 : vector<1x128xf32>
      %c0_37 = arith.constant 0 : index
      %c0_38 = arith.constant 0 : index
      %67 = vector.load %arg18[%c0_37, %c0_38] : memref<1x128xf32, #tpu.memory_space<vmem>>, vector<1x128xf32>
      tpu.vector_store %arg18[%c0_37, %c0_38], %66 {strides = array<i32>} : memref<1x128xf32, #tpu.memory_space<vmem>>, vector<1x128xf32>,
      %c2_i32_39 = arith.constant 2 : i32
      %68 = arith.cmpi eq, %arg0, %c2_i32_39 : i32
      %69 = arith.extui %68 : i1 to i32
      %c0_i32_40 = arith.constant 0 : i32
      %70 = arith.cmpi ne, %69, %c0_i32_40 : i32
      scf.if %70 {
        %c0_41 = arith.constant 0 : index
        %c0_42 = arith.constant 0 : index
        %71 = vector.load %arg16[%c0_41, %c0_42] : memref<2x128xf32, #tpu.memory_space<vmem>>, vector<2x128xf32>
        %c0_43 = arith.constant 0 : index
        %c0_44 = arith.constant 0 : index
        %72 = vector.load %arg5[%c0_43, %c0_44] : memref<2x128xbf16, #tpu.memory_space<vmem>>, vector<2x128xbf16>
        %73 = arith.extf %72 : vector<2x128xbf16> to vector<2x128xf32>
        %cst_45 = arith.constant dense<0.000000e+00> : vector<2x128xf32>
        %74 = tpu.matmul %73, %48, %cst_45 {dimension_numbers = #tpu.dot_dimension_numbers<[1], [0], [0], [1], [0, 0, 1, 1], [], []>} : vector<2x128xf32>, vector<128x128xf32>, vector<2x128xf32> -> vector<2x128xf32>
        %75 = arith.addf %71, %74 : vector<2x128xf32>
        %c0_46 = arith.constant 0 : index
        %c0_47 = arith.constant 0 : index
        %76 = vector.load %arg16[%c0_46, %c0_47] : memref<2x128xf32, #tpu.memory_space<vmem>>, vector<2x128xf32>
        tpu.vector_store %arg16[%c0_46, %c0_47], %75 {strides = array<i32>} : memref<2x128xf32, #tpu.memory_space<vmem>>, vector<2x128xf32>,
      } else {
      }
    } else {
    }
    %c2_i32 = arith.constant 2 : i32
    %25 = arith.cmpi eq, %arg0, %c2_i32 : i32
    %c0_i32_15 = arith.constant 0 : i32
    %26 = arith.cmpi eq, %arg1, %c0_i32_15 : i32
    %c0_i32_16 = arith.constant 0 : i32
    %27 = arith.cmpi eq, %arg2, %c0_i32_16 : i32
    %28 = arith.andi %26, %27 : i1
    %29 = arith.andi %25, %28 : i1
    %30 = arith.extui %29 : i1 to i32
    %c0_i32_17 = arith.constant 0 : i32
    %31 = arith.cmpi ne, %30, %c0_i32_17 : i32
    scf.if %31 {
      %c0_18 = arith.constant 0 : index
      %c0_19 = arith.constant 0 : index
      %32 = vector.load %arg16[%c0_18, %c0_19] : memref<2x128xf32, #tpu.memory_space<vmem>>, vector<2x128xf32>
      %cst_20 = arith.constant dense<0.000000e+00> : vector<128xf32>
      %33 = vector.multi_reduction <add>, %32, %cst_20 [0] : vector<2x128xf32> to vector<128xf32>
      %34 = vector.shape_cast %33 : vector<128xf32> to vector<1x128xf32>
      %cst_21 = arith.constant 5.000000e-01 : f32
      %35 = vector.broadcast %cst_21 : f32 to vector<1x128xf32>
      %36 = arith.mulf %34, %35 : vector<1x128xf32>
      %37 = arith.mulf %32, %32 : vector<2x128xf32>
      %cst_22 = arith.constant dense<0.000000e+00> : vector<128xf32>
      %38 = vector.multi_reduction <add>, %37, %cst_22 [0] : vector<2x128xf32> to vector<128xf32>
      %39 = vector.shape_cast %38 : vector<128xf32> to vector<1x128xf32>
      %cst_23 = arith.constant 5.000000e-01 : f32
      %40 = vector.broadcast %cst_23 : f32 to vector<1x128xf32>
      %41 = arith.mulf %39, %40 : vector<1x128xf32>
      %42 = arith.mulf %36, %36 : vector<1x128xf32>
      %43 = arith.subf %41, %42 : vector<1x128xf32>
      %cst_24 = arith.constant 0.000000e+00 : f32
      %44 = vector.broadcast %cst_24 : f32 to vector<1x128xf32>
      %45 = arith.maximumf %43, %44 : vector<1x128xf32>
      %46 = vector.broadcast %36 : vector<1x128xf32> to vector<2x128xf32>
      %47 = arith.subf %32, %46 : vector<2x128xf32>
      %cst_25 = arith.constant 9.99999974E-6 : f32
      %48 = vector.broadcast %cst_25 : f32 to vector<1x128xf32>
      %49 = arith.addf %45, %48 : vector<1x128xf32>
      %50 = math.rsqrt %49 : vector<1x128xf32>
      %51 = vector.broadcast %50 : vector<1x128xf32> to vector<2x128xf32>
      %52 = arith.mulf %47, %51 : vector<2x128xf32>
      %cst_26 = arith.constant 9.99999974E-5 : f32
      %53 = vector.broadcast %cst_26 : f32 to vector<2x128xf32>
      %54 = arith.addf %52, %53 : vector<2x128xf32>
      %c0_27 = arith.constant 0 : index
      %c0_28 = arith.constant 0 : index
      %55 = vector.load %arg8[%c0_27, %c0_28] : memref<128x128xf32, #tpu.memory_space<vmem>>, vector<128x128xf32>
      %cst_29 = arith.constant dense<0.000000e+00> : vector<2x128xf32>
      %56 = tpu.matmul %54, %55, %cst_29 {dimension_numbers = #tpu.dot_dimension_numbers<[1], [0], [0], [1], [0, 0, 1, 1], [], []>} : vector<2x128xf32>, vector<128x128xf32>, vector<2x128xf32> -> vector<2x128xf32>
      %c0_30 = arith.constant 0 : index
      %c0_31 = arith.constant 0 : index
      %57 = vector.load %arg9[%c0_30, %c0_31] : memref<1x128xf32, #tpu.memory_space<vmem>>, vector<1x128xf32>
      %58 = vector.broadcast %57 : vector<1x128xf32> to vector<2x128xf32>
      %59 = arith.addf %56, %58 : vector<2x128xf32>
      %cst_32 = arith.constant 0.000000e+00 : f32
      %60 = vector.broadcast %cst_32 : f32 to vector<2x128xf32>
      %61 = arith.maximumf %59, %60 : vector<2x128xf32>
      %cst_33 = arith.constant dense<0.000000e+00> : vector<128xf32>
      %62 = vector.multi_reduction <add>, %61, %cst_33 [0] : vector<2x128xf32> to vector<128xf32>
      %63 = vector.shape_cast %62 : vector<128xf32> to vector<1x128xf32>
      %cst_34 = arith.constant 5.000000e-01 : f32
      %64 = vector.broadcast %cst_34 : f32 to vector<1x128xf32>
      %65 = arith.mulf %63, %64 : vector<1x128xf32>
      %66 = arith.mulf %61, %61 : vector<2x128xf32>
      %cst_35 = arith.constant dense<0.000000e+00> : vector<128xf32>
      %67 = vector.multi_reduction <add>, %66, %cst_35 [0] : vector<2x128xf32> to vector<128xf32>
      %68 = vector.shape_cast %67 : vector<128xf32> to vector<1x128xf32>
      %cst_36 = arith.constant 5.000000e-01 : f32
      %69 = vector.broadcast %cst_36 : f32 to vector<1x128xf32>
      %70 = arith.mulf %68, %69 : vector<1x128xf32>
      %71 = arith.mulf %65, %65 : vector<1x128xf32>
      %72 = arith.subf %70, %71 : vector<1x128xf32>
      %cst_37 = arith.constant 0.000000e+00 : f32
      %73 = vector.broadcast %cst_37 : f32 to vector<1x128xf32>
      %74 = arith.maximumf %72, %73 : vector<1x128xf32>
      %75 = vector.broadcast %65 : vector<1x128xf32> to vector<2x128xf32>
      %76 = arith.subf %61, %75 : vector<2x128xf32>
      %cst_38 = arith.constant 9.99999974E-6 : f32
      %77 = vector.broadcast %cst_38 : f32 to vector<1x128xf32>
      %78 = arith.addf %74, %77 : vector<1x128xf32>
      %79 = math.rsqrt %78 : vector<1x128xf32>
      %80 = vector.broadcast %79 : vector<1x128xf32> to vector<2x128xf32>
      %81 = arith.mulf %76, %80 : vector<2x128xf32>
      %cst_39 = arith.constant 9.99999974E-5 : f32
      %82 = vector.broadcast %cst_39 : f32 to vector<2x128xf32>
      %83 = arith.addf %81, %82 : vector<2x128xf32>
      %c0_40 = arith.constant 0 : index
      %c0_41 = arith.constant 0 : index
      %84 = vector.load %arg10[%c0_40, %c0_41] : memref<128x128xf32, #tpu.memory_space<vmem>>, vector<128x128xf32>
      %cst_42 = arith.constant dense<0.000000e+00> : vector<2x128xf32>
      %85 = tpu.matmul %83, %84, %cst_42 {dimension_numbers = #tpu.dot_dimension_numbers<[1], [0], [0], [1], [0, 0, 1, 1], [], []>} : vector<2x128xf32>, vector<128x128xf32>, vector<2x128xf32> -> vector<2x128xf32>
      %c0_43 = arith.constant 0 : index
      %c0_44 = arith.constant 0 : index
      %86 = vector.load %arg11[%c0_43, %c0_44] : memref<1x128xf32, #tpu.memory_space<vmem>>, vector<1x128xf32>
      %87 = vector.broadcast %86 : vector<1x128xf32> to vector<2x128xf32>
      %88 = arith.addf %85, %87 : vector<2x128xf32>
      %89 = tpu.iota {dimensions = array<i32: 1>} : vector<2x128xi32>
      %c4_i32 = arith.constant 4 : i32
      %90 = vector.broadcast %c4_i32 : i32 to vector<2x128xi32>
      %91 = arith.cmpi slt, %89, %90 : vector<2x128xi32>
      %cst_45 = arith.constant -1.000000e+30 : f32
      %92 = vector.broadcast %cst_45 : f32 to vector<2x128xf32>
      %93 = arith.select %91, %88, %92 : vector<2x128xi1>, vector<2x128xf32>
      %cst_46 = arith.constant dense<0xFF800000> : vector<2xf32>
      %94 = vector.multi_reduction <maximumf>, %93, %cst_46 [1] : vector<2x128xf32> to vector<2xf32>
      %95 = vector.shape_cast %94 : vector<2xf32> to vector<2x1xf32>
      %96 = vector.broadcast %95 : vector<2x1xf32> to vector<2x128xf32>
      %97 = arith.subf %93, %96 : vector<2x128xf32>
      %98 = math.exp %97 : vector<2x128xf32>
      %cst_47 = arith.constant dense<0.000000e+00> : vector<2xf32>
      %99 = vector.multi_reduction <add>, %98, %cst_47 [1] : vector<2x128xf32> to vector<2xf32>
      %100 = vector.shape_cast %99 : vector<2xf32> to vector<2x1xf32>
      %101 = math.log %100 : vector<2x1xf32>
      %102 = vector.broadcast %101 : vector<2x1xf32> to vector<2x128xf32>
      %103 = arith.subf %97, %102 : vector<2x128xf32>
      %c0_48 = arith.constant 0 : index
      %c0_49 = arith.constant 0 : index
      %104 = vector.load %arg12[%c0_48, %c0_49] : memref<2x128xf32, #tpu.memory_space<vmem>>, vector<2x128xf32>
      tpu.vector_store %arg12[%c0_48, %c0_49], %103 {strides = array<i32>} : memref<2x128xf32, #tpu.memory_space<vmem>>, vector<2x128xf32>,
    } else {
    }
    return
  }
  func.func @transform_0(%arg0: i32, %arg1: i32, %arg2: i32) -> (i32, i32) {
    %c0_i32 = arith.constant 0 : i32
    %0 = arith.cmpi eq, %arg0, %c0_i32 : i32
    %c0_i32_0 = arith.constant 0 : i32
    %1 = arith.cmpi eq, %arg1, %c0_i32_0 : i32
    %2 = arith.andi %0, %1 : i1
    %c0_i32_1 = arith.constant 0 : i32
    %3 = arith.select %2, %arg2, %c0_i32_1 : i32
    %c0_i32_2 = arith.constant 0 : i32
    %c0_i32_3 = arith.constant 0 : i32
    return %3, %c0_i32_2 : i32, i32
  }
  func.func @transform_1(%arg0: i32, %arg1: i32, %arg2: i32) -> (i32, i32) {
    %c0_i32 = arith.constant 0 : i32
    return %arg1, %arg2 : i32, i32
  }
  func.func @transform_2(%arg0: i32, %arg1: i32, %arg2: i32) -> (i32, i32) {
    %c0_i32 = arith.constant 0 : i32
    %c0_i32_0 = arith.constant 0 : i32
    return %c0_i32, %arg1 : i32, i32
  }
  func.func @transform_3(%arg0: i32, %arg1: i32, %arg2: i32) -> (i32, i32, i32) {
    %c0_i32 = arith.constant 0 : i32
    %c0_i32_0 = arith.constant 0 : i32
    %c0_i32_1 = arith.constant 0 : i32
    return %arg0, %c0_i32, %c0_i32_0 : i32, i32, i32
  }
  func.func @transform_4(%arg0: i32, %arg1: i32, %arg2: i32) -> (i32, i32, i32) {
    %c0_i32 = arith.constant 0 : i32
    %c0_i32_0 = arith.constant 0 : i32
    %c0_i32_1 = arith.constant 0 : i32
    return %arg0, %c0_i32, %c0_i32_0 : i32, i32, i32
  }
  func.func @transform_5(%arg0: i32, %arg1: i32, %arg2: i32) -> (i32, i32) {
    %c0_i32 = arith.constant 0 : i32
    %c0_i32_0 = arith.constant 0 : i32
    %c0_i32_1 = arith.constant 0 : i32
    return %c0_i32, %c0_i32_0 : i32, i32
  }
  func.func @transform_6(%arg0: i32, %arg1: i32, %arg2: i32) -> (i32, i32) {
    %c0_i32 = arith.constant 0 : i32
    %c0_i32_0 = arith.constant 0 : i32
    %c0_i32_1 = arith.constant 0 : i32
    return %c0_i32, %c0_i32_0 : i32, i32
  }
  func.func @transform_7(%arg0: i32, %arg1: i32, %arg2: i32) -> (i32, i32) {
    %c0_i32 = arith.constant 0 : i32
    %c0_i32_0 = arith.constant 0 : i32
    %c0_i32_1 = arith.constant 0 : i32
    return %c0_i32, %c0_i32_0 : i32, i32
  }
  func.func @transform_8(%arg0: i32, %arg1: i32, %arg2: i32) -> (i32, i32) {
    %c0_i32 = arith.constant 0 : i32
    %c0_i32_0 = arith.constant 0 : i32
    %c0_i32_1 = arith.constant 0 : i32
    return %c0_i32, %c0_i32_0 : i32, i32
  }
  func.func @transform_9(%arg0: i32, %arg1: i32, %arg2: i32) -> (i32, i32) {
    %c0_i32 = arith.constant 0 : i32
    %c0_i32_0 = arith.constant 0 : i32
    %c0_i32_1 = arith.constant 0 : i32
    return %c0_i32, %c0_i32_0 : i32, i32
  }
}

</mosaic_0001>

<llo_original>
// kernel: mul.13
$region0: #{mul.13}
  #allocation0 [shape = 's32[1]{0}', space=sflag, size = 0x4, scoped, tag = 'scoped memory for mul.13']
  %s0 = inlined_call_operand.vmem [shape: f32[48], index: 0, kind: input, shape index: {}]
  %s1 = inlined_call_operand.vmem [shape: f32[48], index: 1, kind: input, shape index: {}]
  %s2 = inlined_call_operand.vmem [shape: f32[48], index: 2, kind: output, shape index: {}]
  %v3 = vld [vmem:[%s0] sm:$0x1]
  %v4 = vld [vmem:[%s1] sm:$0x1]
  %5 = xla_tuple %v3, %v4
  %6 = xla_tuple %5
  %v7 = vmul.f32 %v3, %v4
  %8 = xla_tuple %v7
  %9 = vst [vmem:[%s2] sm:$0x1] %v7

// kernel: resgcn_forward.1
$region0: #{resgcn_forward.1}
  #allocation0 [shape = 'u32[]', space=smem, size = 0x4, offset = 0x4, fixed_abs, tag = 'smem constant byte address 0x4 - core index']
  #allocation1 [shape = 'u32[144,128]{1,0:T(1,128)}', space=vmem, size = 0x12000, scoped, tag = 'internal scratch']
  #allocation2 [shape = 'bf16[128,128]{1,0:T(16,128)(2,1)}', space=vmem, size = 0x8000, scoped, tag = 'scratch operand']
  #allocation3 [shape = 'bf16[128,128]{1,0:T(16,128)(2,1)}', space=vmem, size = 0x8000, scoped, tag = 'scratch operand']
  #allocation4 [shape = 'f32[128,128]{1,0:T(8,128)}', space=vmem, size = 0x10000, scoped, tag = 'scratch operand']
  #allocation5 [shape = 'f32[2,128]{1,0:T(2,128)}', space=vmem, size = 0x400, scoped, tag = 'scratch operand']
  #allocation6 [shape = 'f32[1,128]{1,0:T(1,128)}', space=vmem, size = 0x200, scoped, tag = 'scratch operand']
  #allocation7 [shape = 'f32[1,128]{1,0:T(1,128)}', space=vmem, size = 0x200, scoped, tag = 'scratch operand']
  %s0 = inlined_call_operand.vmem [shape: f32[128,128], index: 0, kind: input, shape index: {}]
  %s1 = inlined_call_operand.vmem [shape: bf16[128,128], index: 1, kind: input, shape index: {}]
  %s2 = inlined_call_operand.vmem [shape: bf16[2,128], index: 2, kind: input, shape index: {}]
  %s3 = inlined_call_operand.vmem [shape: f32[3,128,128], index: 3, kind: input, shape index: {}]
  %s4 = inlined_call_operand.vmem [shape: f32[3,1,128], index: 4, kind: input, shape index: {}]
  %s5 = inlined_call_operand.vmem [shape: f32[128,128], index: 5, kind: input, shape index: {}]
  %s6 = inlined_call_operand.vmem [shape: f32[1,128], index: 6, kind: input, shape index: {}]
  %s7 = inlined_call_operand.vmem [shape: f32[128,128], index: 7, kind: input, shape index: {}]
  %s8 = inlined_call_operand.vmem [shape: f32[1,128], index: 8, kind: input, shape index: {}]
  %s9 = inlined_call_operand.hbm [shape: f32[2,128], index: 9, kind: output, shape index: {}]
  %s10 = sld [smem:[#allocation0]]
  $region105: #{resgcn_forward.1} parent=0
    _
  %s12 = ssub.s32 1, %s10
  %s13 = scalar_select 0, %s12, %s10
  $region1: #{resgcn_forward.1} parent=0
    #allocation8 [shape = 'u8[1024]{0}', space=vmem, size = 0x400, scoped, tag = 'output window, operand 0, single buffered']
    #allocation9 [shape = 's32[2]{0}', space=sflag, size = 0x8, scoped, tag = 'scoped memory for resgcn_forward.1']
    %14 = vsyncpa [#allocation9], 0
    loop: start=0, step=1, limit=5
    $region2: #{resgcn_forward.1} parent=1 // loop_pre_header
      _
    $region3: #{resgcn_forward.1} parent=1 // loop_header
      %s16 = sphi 0, %s20
      %p17 = scmp.ge.s32.totalorder %s16, 5
      %s23 = sphi 0, %s42
      %s24 = sphi 0, %s38
      %s25 = sphi 0, %s34
      %s26 = sphi 0, %s23
      %s27 = sphi 0, %s24
      %s28 = sphi 0, %s25
      %s29 = sphi 0, %s26
      %s30 = sphi 0, %s27
      %s31 = sphi 0, %s28
      %s55 = sphi 0, %s57
      %s58 = sphi 0, %s55
      %s59 = sphi 0, %s58
      %s75 = sphi 0, %s59
      %s83 = sphi 0, %s85
      %s86 = sphi 0, %s83
      %s87 = sphi 0, %s86
      %s103 = sphi 0, %s87
      %s109 = sphi 0, %s111
      %s112 = sphi 0, %s109
      %s113 = sphi 0, %s112
      %s129 = sphi 0, %s113
      %s135 = sphi 0, %s137
      %s138 = sphi 0, %s135
      %s139 = sphi 0, %s138
      %s155 = sphi 0, %s139
      %s161 = sphi 0, %s163
      %s164 = sphi 0, %s161
      %s165 = sphi 0, %s164
      %s181 = sphi 0, %s165
      %s185 = sphi 0, %s185
      %s187 = sphi 0, %s185
      %s188 = sphi 0, %s187
      %s202 = sphi 0, %s188
      %s206 = sphi 0, %s206
      %s208 = sphi 0, %s206
      %s209 = sphi 0, %s208
      %s223 = sphi 0, %s209
      %s227 = sphi 0, %s227
      %s229 = sphi 0, %s227
      %s230 = sphi 0, %s229
      %s244 = sphi 0, %s230
      %s248 = sphi 0, %s248
      %s250 = sphi 0, %s248
      %s251 = sphi 0, %s250
      %s265 = sphi 0, %s251
      %s269 = sphi 0, %s269
      %s271 = sphi 0, %s269
      %s272 = sphi 0, %s271
      %s286 = sphi 0, %s272
    $region4: #{resgcn_forward.1} parent=1 // loop_header_branch
      %19 = sbr.rel (%p17) target = $region8
    $region5: #{resgcn_forward.1} parent=1 // loop_body
      %s21 = ssub.s32 %s16, 1
      %s22 = ssub.s32 %s16, 2
      %s32 = sadd.s32 1, %s25
      %p33 = scmp.ge.s32.totalorder %s32, 1
      %s34 = scalar_select %p33, 0, %s32
      %s35 = sadd.s32 1, %s24
      %s36 = scalar_select %p33, %s35, %s24
      %p37 = scmp.ge.s32.totalorder %s36, 1
      %s38 = scalar_select %p37, 0, %s36
      %s39 = sadd.s32 1, %s23
      %s40 = scalar_select %p37, %s39, %s23
      %p41 = scmp.ge.s32.totalorder %s40, 3
      %s42 = scalar_select %p41, 0, %s40
      %p43 = scmp.eq.s32.totalorder %s23, 0
      %p44 = scmp.eq.s32.totalorder %s24, 0
      %p45 = pnand %p43, %p44
      %p46 = pneg %p45
      %s47 = scalar_select %p46, %s25, 0
      %p48 = scmp.eq.s32.totalorder %s42, 0
      %p49 = scmp.eq.s32.totalorder %s38, 0
      %p50 = pnand %p48, %p49
      %p51 = pneg %p50
      %s52 = scalar_select %p51, %s34, 0
      %s53 = ssub.s32 %s47, %s52
      %p54 = scmp.eq.s32.totalorder %s53, 0
      %s56 = sadd.s32 %s55, 1
      %s57 = scalar_select %p54, %s55, %s56
      %p60 = pneg %p54
      %p61 = scmp.eq.s32.totalorder %s16, 2
      %p62 = por %p60, %p61
      %p63 = scmp.ne.s32.totalorder %s55, %s58
      %p64 = scmp.eq.s32.totalorder %s16, 0
      %p65 = por %p63, %p64
      %p66 = scmp.ne.s32.totalorder %s55, %s58
      %p67 = scmp.eq.s32.totalorder %s21, 2
      %p68 = por %p66, %p67
      %p69 = scmp.ne.s32.totalorder %s58, %s59
      %p70 = scmp.eq.s32.totalorder %s21, 0
      %p71 = por %p69, %p70
      %p72 = scmp.ne.s32.totalorder %s58, %s59
      %p73 = scmp.eq.s32.totalorder %s22, 2
      %p74 = por %p72, %p73
      %p76 = scmp.ne.s32.totalorder %s59, %s75
      %p77 = scmp.eq.s32.totalorder %s22, 0
      %p78 = por %p76, %p77
      %s79 = ssub.s32 %s24, %s38
      %s80 = ssub.s32 %s25, %s34
      %s81 = sor.u32 %s79, %s80
      %p82 = scmp.eq.s32.totalorder %s81, 0
      %s84 = sadd.s32 %s83, 1
      %s85 = scalar_select %p82, %s83, %s84
      %p88 = pneg %p82
      %p89 = scmp.eq.s32.totalorder %s16, 2
      %p90 = por %p88, %p89
      %p91 = scmp.ne.s32.totalorder %s83, %s86
      %p92 = scmp.eq.s32.totalorder %s16, 0
      %p93 = por %p91, %p92
      %p94 = scmp.ne.s32.totalorder %s83, %s86
      %p95 = scmp.eq.s32.totalorder %s21, 2
      %p96 = por %p94, %p95
      %p97 = scmp.ne.s32.totalorder %s86, %s87
      %p98 = scmp.eq.s32.totalorder %s21, 0
      %p99 = por %p97, %p98
      %p100 = scmp.ne.s32.totalorder %s86, %s87
      %p101 = scmp.eq.s32.totalorder %s22, 2
      %p102 = por %p100, %p101
      %p104 = scmp.ne.s32.totalorder %s87, %s103
      %p105 = scmp.eq.s32.totalorder %s22, 0
      %p106 = por %p104, %p105
      %s107 = ssub.s32 %s24, %s38
      %p108 = scmp.eq.s32.totalorder %s107, 0
      %s110 = sadd.s32 %s109, 1
      %s111 = scalar_select %p108, %s109, %s110
      %p114 = pneg %p108
      %p115 = scmp.eq.s32.totalorder %s16, 2
      %p116 = por %p114, %p115
      %p117 = scmp.ne.s32.totalorder %s109, %s112
      %p118 = scmp.eq.s32.totalorder %s16, 0
      %p119 = por %p117, %p118
      %p120 = scmp.ne.s32.totalorder %s109, %s112
      %p121 = scmp.eq.s32.totalorder %s21, 2
      %p122 = por %p120, %p121
      %p123 = scmp.ne.s32.totalorder %s112, %s113
      %p124 = scmp.eq.s32.totalorder %s21, 0
      %p125 = por %p123, %p124
      %p126 = scmp.ne.s32.totalorder %s112, %s113
      %p127 = scmp.eq.s32.totalorder %s22, 2
      %p128 = por %p126, %p127
      %p130 = scmp.ne.s32.totalorder %s113, %s129
      %p131 = scmp.eq.s32.totalorder %s22, 0
      %p132 = por %p130, %p131
      %s133 = ssub.s32 %s23, %s42
      %p134 = scmp.eq.s32.totalorder %s133, 0
      %s136 = sadd.s32 %s135, 1
      %s137 = scalar_select %p134, %s135, %s136
      %p140 = pneg %p134
      %p141 = scmp.eq.s32.totalorder %s16, 2
      %p142 = por %p140, %p141
      %p143 = scmp.ne.s32.totalorder %s135, %s138
      %p144 = scmp.eq.s32.totalorder %s16, 0
      %p145 = por %p143, %p144
      %p146 = scmp.ne.s32.totalorder %s135, %s138
      %p147 = scmp.eq.s32.totalorder %s21, 2
      %p148 = por %p146, %p147
      %p149 = scmp.ne.s32.totalorder %s138, %s139
      %p150 = scmp.eq.s32.totalorder %s21, 0
      %p151 = por %p149, %p150
      %p152 = scmp.ne.s32.totalorder %s138, %s139
      %p153 = scmp.eq.s32.totalorder %s22, 2
      %p154 = por %p152, %p153
      %p156 = scmp.ne.s32.totalorder %s139, %s155
      %p157 = scmp.eq.s32.totalorder %s22, 0
      %p158 = por %p156, %p157
      %s159 = ssub.s32 %s23, %s42
      %p160 = scmp.eq.s32.totalorder %s159, 0
      %s162 = sadd.s32 %s161, 1
      %s163 = scalar_select %p160, %s161, %s162
      %p166 = pneg %p160
      %p167 = scmp.eq.s32.totalorder %s16, 2
      %p168 = por %p166, %p167
      %p169 = scmp.ne.s32.totalorder %s161, %s164
      %p170 = scmp.eq.s32.totalorder %s16, 0
      %p171 = por %p169, %p170
      %p172 = scmp.ne.s32.totalorder %s161, %s164
      %p173 = scmp.eq.s32.totalorder %s21, 2
      %p174 = por %p172, %p173
      %p175 = scmp.ne.s32.totalorder %s164, %s165
      %p176 = scmp.eq.s32.totalorder %s21, 0
      %p177 = por %p175, %p176
      %p178 = scmp.ne.s32.totalorder %s164, %s165
      %p179 = scmp.eq.s32.totalorder %s22, 2
      %p180 = por %p178, %p179
      %p182 = scmp.ne.s32.totalorder %s165, %s181
      %p183 = scmp.eq.s32.totalorder %s22, 0
      %p184 = por %p182, %p183
      %s186 = sadd.s32 %s185, 1
      %p189 = scmp.eq.s32.totalorder %s16, 2
      %p190 = scmp.ne.s32.totalorder %s185, %s187
      %p191 = scmp.eq.s32.totalorder %s16, 0
      %p192 = por %p190, %p191
      %p193 = scmp.ne.s32.totalorder %s185, %s187
      %p194 = scmp.eq.s32.totalorder %s21, 2
      %p195 = por %p193, %p194
      %p196 = scmp.ne.s32.totalorder %s187, %s188
      %p197 = scmp.eq.s32.totalorder %s21, 0
      %p198 = por %p196, %p197
      %p199 = scmp.ne.s32.totalorder %s187, %s188
      %p200 = scmp.eq.s32.totalorder %s22, 2
      %p201 = por %p199, %p200
      %p203 = scmp.ne.s32.totalorder %s188, %s202
      %p204 = scmp.eq.s32.totalorder %s22, 0
      %p205 = por %p203, %p204
      %s207 = sadd.s32 %s206, 1
      %p210 = scmp.eq.s32.totalorder %s16, 2
      %p211 = scmp.ne.s32.totalorder %s206, %s208
      %p212 = scmp.eq.s32.totalorder %s16, 0
      %p213 = por %p211, %p212
      %p214 = scmp.ne.s32.totalorder %s206, %s208
      %p215 = scmp.eq.s32.totalorder %s21, 2
      %p216 = por %p214, %p215
      %p217 = scmp.ne.s32.totalorder %s208, %s209
      %p218 = scmp.eq.s32.totalorder %s21, 0
      %p219 = por %p217, %p218
      %p220 = scmp.ne.s32.totalorder %s208, %s209
      %p221 = scmp.eq.s32.totalorder %s22, 2
      %p222 = por %p220, %p221
      %p224 = scmp.ne.s32.totalorder %s209, %s223
      %p225 = scmp.eq.s32.totalorder %s22, 0
      %p226 = por %p224, %p225
      %s228 = sadd.s32 %s227, 1
      %p231 = scmp.eq.s32.totalorder %s16, 2
      %p232 = scmp.ne.s32.totalorder %s227, %s229
      %p233 = scmp.eq.s32.totalorder %s16, 0
      %p234 = por %p232, %p233
      %p235 = scmp.ne.s32.totalorder %s227, %s229
      %p236 = scmp.eq.s32.totalorder %s21, 2
      %p237 = por %p235, %p236
      %p238 = scmp.ne.s32.totalorder %s229, %s230
      %p239 = scmp.eq.s32.totalorder %s21, 0
      %p240 = por %p238, %p239
      %p241 = scmp.ne.s32.totalorder %s229, %s230
      %p242 = scmp.eq.s32.totalorder %s22, 2
      %p243 = por %p241, %p242
      %p245 = scmp.ne.s32.totalorder %s230, %s244
      %p246 = scmp.eq.s32.totalorder %s22, 0
      %p247 = por %p245, %p246
      %s249 = sadd.s32 %s248, 1
      %p252 = scmp.eq.s32.totalorder %s16, 2
      %p253 = scmp.ne.s32.totalorder %s248, %s250
      %p254 = scmp.eq.s32.totalorder %s16, 0
      %p255 = por %p253, %p254
      %p256 = scmp.ne.s32.totalorder %s248, %s250
      %p257 = scmp.eq.s32.totalorder %s21, 2
      %p258 = por %p256, %p257
      %p259 = scmp.ne.s32.totalorder %s250, %s251
      %p260 = scmp.eq.s32.totalorder %s21, 0
      %p261 = por %p259, %p260
      %p262 = scmp.ne.s32.totalorder %s250, %s251
      %p263 = scmp.eq.s32.totalorder %s22, 2
      %p264 = por %p262, %p263
      %p266 = scmp.ne.s32.totalorder %s251, %s265
      %p267 = scmp.eq.s32.totalorder %s22, 0
      %p268 = por %p266, %p267
      %s270 = sadd.s32 %s269, 1
      %p273 = scmp.eq.s32.totalorder %s16, 2
      %p274 = scmp.ne.s32.totalorder %s269, %s271
      %p275 = scmp.eq.s32.totalorder %s16, 0
      %p276 = por %p274, %p275
      %p277 = scmp.ne.s32.totalorder %s269, %s271
      %p278 = scmp.eq.s32.totalorder %s21, 2
      %p279 = por %p277, %p278
      %p280 = scmp.ne.s32.totalorder %s271, %s272
      %p281 = scmp.eq.s32.totalorder %s21, 0
      %p282 = por %p280, %p281
      %p283 = scmp.ne.s32.totalorder %s271, %s272
      %p284 = scmp.eq.s32.totalorder %s22, 2
      %p285 = por %p283, %p284
      %p287 = scmp.ne.s32.totalorder %s272, %s286
      %p288 = scmp.eq.s32.totalorder %s22, 0
      %p289 = por %p287, %p288
      %p290 = scmp.le.s32.totalorder 1, %s16
      %p291 = scmp.lt.s32.totalorder %s16, 4
      %p292 = pnand %p290, %p291
      %p293 = pneg %p292
      // Predicated region
      $region9: #{resgcn_forward.1} parent=5 // pred_check
        _
      $region10: #{resgcn_forward.1} parent=5 // pred_check_branch
        %295 = sbr.rel (%p292) target = $region12
      $region11: #{resgcn_forward.1} parent=5 // pred_region
        %s296 = ssub.s32 %s16, 1
        // Predicated region
        $region13: #{resgcn_forward.1} parent=11 // pred_check
          %p297 = pneg %p99
        $region14: #{resgcn_forward.1} parent=11 // pred_check_branch
          %299 = sbr.rel (%p297) target = $region16
        $region15: #{resgcn_forward.1} parent=11 // pred_region
          %s300 = smul.u32 16, %s27
          %p301 = scmp.lt.s32.totalorder %s300, 15
          %s302 = scalar_select %p301, %s300, 15
          %p303 = scmp.lt.s32.totalorder %s28, 0
          %s304 = scalar_select %p303, %s28, 0
          %s305 = sadd.s32 %s304, %s302
          %s306 = smul.addr %s305, 4
          %s307 = scalar_lea.vmem %s1, %s306
          %s308 = smul.u32 16, %s27
        $region16: #{resgcn_forward.1} parent=11 // pred_fallthru
          _
        // Predicated region
        $region17: #{resgcn_forward.1} parent=11 // pred_check
          %p309 = pneg %p125
        $region18: #{resgcn_forward.1} parent=11 // pred_check_branch
          %311 = sbr.rel (%p309) target = $region20
        $region19: #{resgcn_forward.1} parent=11 // pred_region
          %p312 = scmp.lt.s32.totalorder %s27, 0
          %s313 = scalar_select %p312, %s27, 0
          %s314 = scalar_lea.vmem %s2, %s313
        $region20: #{resgcn_forward.1} parent=11 // pred_fallthru
          _
        // Predicated region
        $region21: #{resgcn_forward.1} parent=11 // pred_check
          %p315 = pneg %p198
        $region22: #{resgcn_forward.1} parent=11 // pred_check_branch
          %317 = sbr.rel (%p315) target = $region24
        $region23: #{resgcn_forward.1} parent=11 // pred_region
          _
        $region24: #{resgcn_forward.1} parent=11 // pred_fallthru
          _
        // Predicated region
        $region25: #{resgcn_forward.1} parent=11 // pred_check
          %p318 = pneg %p219
        $region26: #{resgcn_forward.1} parent=11 // pred_check_branch
          %320 = sbr.rel (%p318) target = $region28
        $region27: #{resgcn_forward.1} parent=11 // pred_region
          _
        $region28: #{resgcn_forward.1} parent=11 // pred_fallthru
          _
        // Predicated region
        $region29: #{resgcn_forward.1} parent=11 // pred_check
          %p321 = pneg %p240
        $region30: #{resgcn_forward.1} parent=11 // pred_check_branch
          %323 = sbr.rel (%p321) target = $region32
        $region31: #{resgcn_forward.1} parent=11 // pred_region
          _
        $region32: #{resgcn_forward.1} parent=11 // pred_fallthru
          _
        // Predicated region
        $region33: #{resgcn_forward.1} parent=11 // pred_check
          %p324 = pneg %p261
        $region34: #{resgcn_forward.1} parent=11 // pred_check_branch
          %326 = sbr.rel (%p324) target = $region36
        $region35: #{resgcn_forward.1} parent=11 // pred_region
          _
        $region36: #{resgcn_forward.1} parent=11 // pred_fallthru
          _
      $region12: #{resgcn_forward.1} parent=5 // pred_fallthru
        _
      %p327 = scmp.lt.s32.totalorder %s16, 3
      // Predicated region
      $region37: #{resgcn_forward.1} parent=5 // pred_check
        %p328 = pneg %p327
      $region38: #{resgcn_forward.1} parent=5 // pred_check_branch
        %330 = sbr.rel (%p328) target = $region40
      $region39: #{resgcn_forward.1} parent=5 // pred_region
        // Predicated region
        $region41: #{resgcn_forward.1} parent=39 // pred_check
          %p331 = pneg %p65
        $region42: #{resgcn_forward.1} parent=39 // pred_check_branch
          %333 = sbr.rel (%p331) target = $region44
        $region43: #{resgcn_forward.1} parent=39 // pred_region
          %p334 = scmp.eq.s32.totalorder %s23, 0
          %p335 = scmp.eq.s32.totalorder %s24, 0
          %p336 = pnand %p334, %p335
          %p337 = pneg %p336
          %s338 = scalar_select %p337, %s25, 0
          %s339 = smul.u32 16, %s338
          %p340 = scmp.lt.s32.totalorder %s339, 15
          %s341 = scalar_select %p340, %s339, 15
          %s342 = smul.addr %s341, 8
          %s343 = scalar_lea.vmem %s0, %s342
          %p344 = scmp.eq.s32.totalorder %s23, 0
          %p345 = scmp.eq.s32.totalorder %s24, 0
          %p346 = pnand %p344, %p345
          %p347 = pneg %p346
          %s348 = scalar_select %p347, %s25, 0
          %s349 = smul.u32 16, %s348
        $region44: #{resgcn_forward.1} parent=39 // pred_fallthru
          _
        // Predicated region
        $region45: #{resgcn_forward.1} parent=39 // pred_check
          %p350 = pneg %p145
        $region46: #{resgcn_forward.1} parent=39 // pred_check_branch
          %352 = sbr.rel (%p350) target = $region48
        $region47: #{resgcn_forward.1} parent=39 // pred_region
          %p353 = scmp.lt.s32.totalorder %s23, 2
          %s354 = scalar_select %p353, %s23, 2
          %s355 = smul.addr %s354, 16
          %s356 = smul.addr %s355, 8
          %s357 = scalar_lea.vmem %s3, %s356
        $region48: #{resgcn_forward.1} parent=39 // pred_fallthru
          _
        // Predicated region
        $region49: #{resgcn_forward.1} parent=39 // pred_check
          %p358 = pneg %p171
        $region50: #{resgcn_forward.1} parent=39 // pred_check_branch
          %360 = sbr.rel (%p358) target = $region52
        $region51: #{resgcn_forward.1} parent=39 // pred_region
          %p361 = scmp.lt.s32.totalorder %s23, 2
          %s362 = scalar_select %p361, %s23, 2
          %s363 = scalar_lea.vmem %s4, %s362
        $region52: #{resgcn_forward.1} parent=39 // pred_fallthru
          _
      $region40: #{resgcn_forward.1} parent=5 // pred_fallthru
        _
      %p364 = scmp.le.s32.totalorder 1, %s16
      %p365 = scmp.lt.s32.totalorder %s16, 4
      %p366 = pnand %p364, %p365
      %p367 = pneg %p366
      // Predicated region
      $region53: #{resgcn_forward.1} parent=5 // pred_check
        _
      $region54: #{resgcn_forward.1} parent=5 // pred_check_branch
        %369 = sbr.rel (%p366) target = $region56
      $region55: #{resgcn_forward.1} parent=5 // pred_region
        %s370 = ssub.s32 %s16, 1
        %p371 = scmp.eq.s32.totalorder %s26, 0
        %p372 = scmp.eq.s32.totalorder %s27, 0
        %p373 = pnand %p371, %p372
        %p374 = pneg %p373
        %s375 = scalar_select %p374, %s28, 0
        %s376 = smul.u32 16, %s375
        %p377 = scmp.lt.s32.totalorder %s376, 15
        %s378 = scalar_select %p377, %s376, 15
        %s379 = smul.addr %s378, 8
        %s380 = scalar_lea.vmem %s0, %s379
        %p381 = pneg %p71
        %p382 = pneg %p68
        %s383 = smul.u32 16, %s27
        %p384 = scmp.lt.s32.totalorder %s383, 15
        %s385 = scalar_select %p384, %s383, 15
        %p386 = scmp.lt.s32.totalorder %s28, 0
        %s387 = scalar_select %p386, %s28, 0
        %s388 = sadd.s32 %s387, %s385
        %s389 = smul.addr %s388, 4
        %s390 = scalar_lea.vmem %s1, %s389
        %p391 = pneg %p99
        %p392 = pneg %p96
        %p393 = scmp.lt.s32.totalorder %s27, 0
        %s394 = scalar_select %p393, %s27, 0
        %s395 = scalar_lea.vmem %s2, %s394
        %p396 = pneg %p125
        %p397 = pneg %p122
        %p398 = scmp.lt.s32.totalorder %s26, 2
        %s399 = scalar_select %p398, %s26, 2
        %s400 = smul.addr %s399, 16
        %s401 = smul.addr %s400, 8
        %s402 = scalar_lea.vmem %s3, %s401
        %p403 = pneg %p151
        %p404 = pneg %p148
        %p405 = scmp.lt.s32.totalorder %s26, 2
        %s406 = scalar_select %p405, %s26, 2
        %s407 = scalar_lea.vmem %s4, %s406
        %p408 = pneg %p177
        %p409 = pneg %p174
        %p410 = pneg %p198
        %p411 = pneg %p195
        %p412 = pneg %p219
        %p413 = pneg %p216
        %p414 = pneg %p240
        %p415 = pneg %p237
        %p416 = pneg %p261
        %p417 = pneg %p258
        %p418 = pneg %p282
        %p419 = pneg %p279
        %p420 = scmp.eq.s32.totalorder %s26, 0
        %p421 = scmp.eq.s32.totalorder %s27, 0
        %p422 = pnand %p420, %p421
        %p423 = pneg %p422
        %s424 = scalar_select %p423, %s28, 0
        %s425 = smul.u32 16, %s424
        %p426 = scmp.lt.s32.totalorder %s425, 15
        %s427 = scalar_select %p426, %s425, 15
        %s428 = smul.addr %s427, 8
        %s429 = scalar_lea.vmem %s0, %s428
        %p430 = scmp.eq.s32.totalorder %s26, 0
        %p431 = scmp.eq.s32.totalorder %s27, 0
        %p432 = pnand %p430, %p431
        %p433 = pneg %p432
        %s434 = scalar_select %p433, %s28, 0
        %s435 = smul.u32 16, %s434
        %s436 = smul.u32 16, %s27
        %p437 = scmp.lt.s32.totalorder %s436, 15
        %s438 = scalar_select %p437, %s436, 15
        %p439 = scmp.lt.s32.totalorder %s28, 0
        %s440 = scalar_select %p439, %s28, 0
        %s441 = sadd.s32 %s440, %s438
        %s442 = smul.addr %s441, 4
        %s443 = scalar_lea.vmem %s1, %s442
        %s444 = smul.u32 16, %s27
        %p445 = scmp.lt.s32.totalorder %s27, 0
        %s446 = scalar_select %p445, %s27, 0
        %s447 = scalar_lea.vmem %s2, %s446
        %p448 = scmp.lt.s32.totalorder %s26, 2
        %s449 = scalar_select %p448, %s26, 2
        %s450 = smul.addr %s449, 16
        %s451 = smul.addr %s450, 8
        %s452 = scalar_lea.vmem %s3, %s451
        %p453 = scmp.lt.s32.totalorder %s26, 2
        %s454 = scalar_select %p453, %s26, 2
        %s455 = scalar_lea.vmem %s4, %s454
        %p457 = scmp.eq.s32.totalorder %s26, 0
        %p458 = scmp.eq.s32.totalorder %s27, 0
        %p459 = scmp.eq.s32.totalorder %s28, 0
        %p460 = pnand %p458, %p459
        %p461 = pneg %p460
        %p462 = pnand %p457, %p461
        %p463 = pneg %p462
        // Predicated region
        $region57: #{resgcn_forward.1} parent=55 // pred_check
          _
        $region58: #{resgcn_forward.1} parent=55 // pred_check_branch
          %465 = sbr.rel (%p462) target = $region60
        $region59: #{resgcn_forward.1} parent=55 // pred_region
          %466 = vst [vmem:[#allocation5] sm:$0x3] 0.0
          %467 = vst [vmem:[#allocation8] sm:$0x3] 0.0
        $region60: #{resgcn_forward.1} parent=55 // pred_fallthru
          _
        %s468 = smul.u32 %s28, 128
        // Predicated region
        $region61: #{resgcn_forward.1} parent=55 // pred_check
          %p469 = pneg %p458
        $region62: #{resgcn_forward.1} parent=55 // pred_check_branch
          %471 = sbr.rel (%p469) target = $region64
        $region63: #{resgcn_forward.1} parent=55 // pred_region
          // Predicated region
          $region65: #{resgcn_forward.1} parent=63 // pred_check
            %p472 = pneg %p457
          $region66: #{resgcn_forward.1} parent=63 // pred_check_branch
            %474 = sbr.rel (%p472) target = $region68
          $region67: #{resgcn_forward.1} parent=63 // pred_region
            %v475 = vld [vmem:[%s429] sm:$0xff]
            %v476 = vld [vmem:[%s429 + $0x8] sm:$0xff]
            %v477 = vld [vmem:[%s429 + $0x10] sm:$0xff]
            %v478 = vld [vmem:[%s429 + $0x18] sm:$0xff]
            %v479 = vld [vmem:[%s429 + $0x20] sm:$0xff]
            %v480 = vld [vmem:[%s429 + $0x28] sm:$0xff]
            %v481 = vld [vmem:[%s429 + $0x30] sm:$0xff]
            %v482 = vld [vmem:[%s429 + $0x38] sm:$0xff]
            %v483 = vld [vmem:[%s429 + $0x40] sm:$0xff]
            %v484 = vld [vmem:[%s429 + $0x48] sm:$0xff]
            %v485 = vld [vmem:[%s429 + $0x50] sm:$0xff]
            %v486 = vld [vmem:[%s429 + $0x58] sm:$0xff]
            %v487 = vld [vmem:[%s429 + $0x60] sm:$0xff]
            %v488 = vld [vmem:[%s429 + $0x68] sm:$0xff]
            %v489 = vld [vmem:[%s429 + $0x70] sm:$0xff]
            %v490 = vld [vmem:[%s429 + $0x78] sm:$0xff]
            %v491 = vld [vmem:[%s452] sm:$0xff]
            %v492 = vld [vmem:[%s452 + $0x8] sm:$0xff]
            %v493 = vld [vmem:[%s452 + $0x10] sm:$0xff]
            %v494 = vld [vmem:[%s452 + $0x18] sm:$0xff]
            %v495 = vld [vmem:[%s452 + $0x20] sm:$0xff]
            %v496 = vld [vmem:[%s452 + $0x28] sm:$0xff]
            %v497 = vld [vmem:[%s452 + $0x30] sm:$0xff]
            %v498 = vld [vmem:[%s452 + $0x38] sm:$0xff]
            %v499 = vld [vmem:[%s452 + $0x40] sm:$0xff]
            %v500 = vld [vmem:[%s452 + $0x48] sm:$0xff]
            %v501 = vld [vmem:[%s452 + $0x50] sm:$0xff]
            %v502 = vld [vmem:[%s452 + $0x58] sm:$0xff]
            %v503 = vld [vmem:[%s452 + $0x60] sm:$0xff]
            %v504 = vld [vmem:[%s452 + $0x68] sm:$0xff]
            %v505 = vld [vmem:[%s452 + $0x70] sm:$0xff]
            %v506 = vld [vmem:[%s452 + $0x78] sm:$0xff]
            %507 = vmatprep.subr.mxu0 0.0
            %508 = vmatpush1.msra.mxu0 %v491
            %509 = vmatprep.subr.mxu0 0.0
            %510 = vmatpush1.msra.mxu0 %v492
            %511 = vmatprep.subr.mxu0 0.0
            %512 = vmatpush1.msra.mxu0 %v493
            %513 = vmatprep.subr.mxu0 0.0
            %514 = vmatpush1.msra.mxu0 %v494
            %515 = vmatprep.subr.mxu0 0.0
            %516 = vmatpush1.msra.mxu0 %v495
            %517 = vmatprep.subr.mxu0 0.0
            %518 = vmatpush1.msra.mxu0 %v496
            %519 = vmatprep.subr.mxu0 0.0
            %520 = vmatpush1.msra.mxu0 %v497
            %521 = vmatprep.subr.mxu0 0.0
            %522 = vmatpush1.msra.mxu0 %v498
            %523 = vmatprep.subr.mxu0 0.0
            %524 = vmatpush1.msra.mxu0 %v499
            %525 = vmatprep.subr.mxu0 0.0
            %526 = vmatpush1.msra.mxu0 %v500
            %527 = vmatprep.subr.mxu0 0.0
            %528 = vmatpush1.msra.mxu0 %v501
            %529 = vmatprep.subr.mxu0 0.0
            %530 = vmatpush1.msra.mxu0 %v502
            %531 = vmatprep.subr.mxu0 0.0
            %532 = vmatpush1.msra.mxu0 %v503
            %533 = vmatprep.subr.mxu0 0.0
            %534 = vmatpush1.msra.mxu0 %v504
            %535 = vmatprep.subr.mxu0 0.0
            %536 = vmatpush1.msra.mxu0 %v505
            %537 = vmatprep.subr.mxu0 0.0
            %538 = vmatpush1.msra.mxu0 %v506
            %539 = vmatprep.subr.mxu0 0.0
            %540 = vmatpush1.msra.mxu0 0.0
            %541 = vmatprep.subr.mxu0 0.0
            %542 = vmatpush1.msra.mxu0 0.0
            %543 = vmatprep.subr.mxu0 0.0
            %544 = vmatpush1.msra.mxu0 0.0
            %545 = vmatprep.subr.mxu0 0.0
            %546 = vmatpush1.msra.mxu0 0.0
            %547 = vmatprep.subr.mxu0 0.0
            %548 = vmatpush1.msra.mxu0 0.0
            %549 = vmatprep.subr.mxu0 0.0
            %550 = vmatpush1.msra.mxu0 0.0
            %551 = vmatprep.subr.mxu0 0.0
            %552 = vmatpush1.msra.mxu0 0.0
            %553 = vmatprep.subr.mxu0 0.0
            %554 = vmatpush1.msra.mxu0 0.0
            %555 = vmatprep.subr.mxu0 0.0
            %556 = vmatpush1.msra.mxu0 0.0
            %557 = vmatprep.subr.mxu0 0.0
            %558 = vmatpush1.msra.mxu0 0.0
            %559 = vmatprep.subr.mxu0 0.0
            %560 = vmatpush1.msra.mxu0 0.0
            %561 = vmatprep.subr.mxu0 0.0
            %562 = vmatpush1.msra.mxu0 0.0
            %563 = vmatprep.subr.mxu0 0.0
            %564 = vmatpush1.msra.mxu0 0.0
            %565 = vmatprep.subr.mxu0 0.0
            %566 = vmatpush1.msra.mxu0 0.0
            %567 = vmatprep.subr.mxu0 0.0
            %568 = vmatpush1.msra.mxu0 0.0
            %569 = vmatprep.subr.mxu0 0.0
            %570 = vmatpush1.msra.mxu0 0.0
            %571 = vmatprep.mubr.f32.mxu0 0.0
            %572 = vmatmul.mubr.f32.gmra.mrb[0].mxu0 %v475
            %v573 = vpop.f32.mrb[0].mxu0
            %v574 = vadd.f32 0.0, %v573
            %v575 = vpop.f32.mrb[0].mxu0
            %576 = vmatprep.mubr.f32.mxu0 0.0
            %577 = vmatmul.mubr.f32.gmra.mrb[0].mxu0 %v476
            %v578 = vpop.f32.mrb[0].mxu0
            %v579 = vadd.f32 0.0, %v578
            %v580 = vpop.f32.mrb[0].mxu0
            %581 = vmatprep.mubr.f32.mxu0 0.0
            %582 = vmatmul.mubr.f32.gmra.mrb[0].mxu0 %v477
            %v583 = vpop.f32.mrb[0].mxu0
            %v584 = vadd.f32 0.0, %v583
            %v585 = vpop.f32.mrb[0].mxu0
            %586 = vmatprep.mubr.f32.mxu0 0.0
            %587 = vmatmul.mubr.f32.gmra.mrb[0].mxu0 %v478
            %v588 = vpop.f32.mrb[0].mxu0
            %v589 = vadd.f32 0.0, %v588
            %v590 = vpop.f32.mrb[0].mxu0
            %591 = vmatprep.mubr.f32.mxu0 0.0
            %592 = vmatmul.mubr.f32.gmra.mrb[0].mxu0 %v479
            %v593 = vpop.f32.mrb[0].mxu0
            %v594 = vadd.f32 0.0, %v593
            %v595 = vpop.f32.mrb[0].mxu0
            %596 = vmatprep.mubr.f32.mxu0 0.0
            %597 = vmatmul.mubr.f32.gmra.mrb[0].mxu0 %v480
            %v598 = vpop.f32.mrb[0].mxu0
            %v599 = vadd.f32 0.0, %v598
            %v600 = vpop.f32.mrb[0].mxu0
            %601 = vmatprep.mubr.f32.mxu0 0.0
            %602 = vmatmul.mubr.f32.gmra.mrb[0].mxu0 %v481
            %v603 = vpop.f32.mrb[0].mxu0
            %v604 = vadd.f32 0.0, %v603
            %v605 = vpop.f32.mrb[0].mxu0
            %606 = vmatprep.mubr.f32.mxu0 0.0
            %607 = vmatmul.mubr.f32.gmra.mrb[0].mxu0 %v482
            %v608 = vpop.f32.mrb[0].mxu0
            %v609 = vadd.f32 0.0, %v608
            %v610 = vpop.f32.mrb[0].mxu0
            %611 = vmatprep.mubr.f32.mxu0 0.0
            %612 = vmatmul.mubr.f32.gmra.mrb[0].mxu0 %v483
            %v613 = vpop.f32.mrb[0].mxu0
            %v614 = vadd.f32 0.0, %v613
            %v615 = vpop.f32.mrb[0].mxu0
            %616 = vmatprep.mubr.f32.mxu0 0.0
            %617 = vmatmul.mubr.f32.gmra.mrb[0].mxu0 %v484
            %v618 = vpop.f32.mrb[0].mxu0
            %v619 = vadd.f32 0.0, %v618
            %v620 = vpop.f32.mrb[0].mxu0
            %621 = vmatprep.mubr.f32.mxu0 0.0
            %622 = vmatmul.mubr.f32.gmra.mrb[0].mxu0 %v485
            %v623 = vpop.f32.mrb[0].mxu0
            %v624 = vadd.f32 0.0, %v623
            %v625 = vpop.f32.mrb[0].mxu0
            %626 = vmatprep.mubr.f32.mxu0 0.0
            %627 = vmatmul.mubr.f32.gmra.mrb[0].mxu0 %v486
            %v628 = vpop.f32.mrb[0].mxu0
            %v629 = vadd.f32 0.0, %v628
            %v630 = vpop.f32.mrb[0].mxu0
            %631 = vmatprep.mubr.f32.mxu0 0.0
            %632 = vmatmul.mubr.f32.gmra.mrb[0].mxu0 %v487
            %v633 = vpop.f32.mrb[0].mxu0
            %v634 = vadd.f32 0.0, %v633
            %v635 = vpop.f32.mrb[0].mxu0
            %636 = vmatprep.mubr.f32.mxu0 0.0
            %637 = vmatmul.mubr.f32.gmra.mrb[0].mxu0 %v488
            %v638 = vpop.f32.mrb[0].mxu0
            %v639 = vadd.f32 0.0, %v638
            %v640 = vpop.f32.mrb[0].mxu0
            %641 = vmatprep.mubr.f32.mxu0 0.0
            %642 = vmatmul.mubr.f32.gmra.mrb[0].mxu0 %v489
            %v643 = vpop.f32.mrb[0].mxu0
            %v644 = vadd.f32 0.0, %v643
            %v645 = vpop.f32.mrb[0].mxu0
            %646 = vmatprep.mubr.f32.mxu0 0.0
            %647 = vmatmul.mubr.f32.gmra.mrb[0].mxu0 %v490
            %v648 = vpop.f32.mrb[0].mxu0
            %v649 = vadd.f32 0.0, %v648
            %v650 = vpop.f32.mrb[0].mxu0
            %651 = vdwg.mxu0
            %v652 = vpack.c.bf16 %v579, %v574
            %v653 = vpack.c.bf16 %v589, %v584
            %v654 = vpack.c.bf16 %v599, %v594
            %v655 = vpack.c.bf16 %v609, %v604
            %v656 = vpack.c.bf16 %v619, %v614
            %v657 = vpack.c.bf16 %v629, %v624
            %v658 = vpack.c.bf16 %v639, %v634
            %v659 = vpack.c.bf16 %v649, %v644
            %s660 = sshra.s32 %s468, 4
            %s661 = sand.u32 %s468, 15
            %s662 = smul.addr %s660, 8
            %s663 = scalar_lea.vmem [#allocation3], %s662
            %664 = vst [vmem:[%s663] sm:$0xff] %v652
            %665 = vst [vmem:[%s663 + $0x8] sm:$0xff] %v653
            %666 = vst [vmem:[%s663 + $0x10] sm:$0xff] %v654
            %667 = vst [vmem:[%s663 + $0x18] sm:$0xff] %v655
            %668 = vst [vmem:[%s663 + $0x20] sm:$0xff] %v656
            %669 = vst [vmem:[%s663 + $0x28] sm:$0xff] %v657
            %670 = vst [vmem:[%s663 + $0x30] sm:$0xff] %v658
            %671 = vst [vmem:[%s663 + $0x38] sm:$0xff] %v659
          $region68: #{resgcn_forward.1} parent=63 // pred_fallthru
            _
          %p672 = scmp.gt.s32.totalorder %s26, 0
          // Predicated region
          $region69: #{resgcn_forward.1} parent=63 // pred_check
            %p673 = pneg %p672
          $region70: #{resgcn_forward.1} parent=63 // pred_check_branch
            %675 = sbr.rel (%p673) target = $region72
          $region71: #{resgcn_forward.1} parent=63 // pred_region
            %v676 = vld [vmem:[#allocation6] sm:$0x1]
            %v677 = vmul.f32 %v676, 0.0625
            %v678 = vld [vmem:[#allocation7] sm:$0x1]
            %v679 = vmul.f32 %v678, 0.0625
            %v680 = vmul.f32 %v677, %v677
            %v681 = vsub.f32 %v679, %v680
            %v682 = vmax.f32 %v681, 0.0
            %s683 = sshra.s32 %s468, 4
            %s684 = sand.u32 %s468, 15
            %s685 = smul.addr %s683, 8
            %s686 = scalar_lea.vmem [#allocation2], %s685
            %v687 = vld [vmem:[%s686] sm:$0xff]
            %v688 = vld [vmem:[%s686 + $0x8] sm:$0xff]
            %v689 = vld [vmem:[%s686 + $0x10] sm:$0xff]
            %v690 = vld [vmem:[%s686 + $0x18] sm:$0xff]
            %v691 = vld [vmem:[%s686 + $0x20] sm:$0xff]
            %v692 = vld [vmem:[%s686 + $0x28] sm:$0xff]
            %v693 = vld [vmem:[%s686 + $0x30] sm:$0xff]
            %v694 = vld [vmem:[%s686 + $0x38] sm:$0xff]
            %v695 = vunpack.c.l.bf16 %v687
            %v696 = vunpack.c.h.bf16 %v687
            %v697 = vunpack.c.l.bf16 %v688
            %v698 = vunpack.c.h.bf16 %v688
            %v699 = vunpack.c.l.bf16 %v689
            %v700 = vunpack.c.h.bf16 %v689
            %v701 = vunpack.c.l.bf16 %v690
            %v702 = vunpack.c.h.bf16 %v690
            %v703 = vunpack.c.l.bf16 %v691
            %v704 = vunpack.c.h.bf16 %v691
            %v705 = vunpack.c.l.bf16 %v692
            %v706 = vunpack.c.h.bf16 %v692
            %v707 = vunpack.c.l.bf16 %v693
            %v708 = vunpack.c.h.bf16 %v693
            %v709 = vunpack.c.l.bf16 %v694
            %v710 = vunpack.c.h.bf16 %v694
            %v712 = vlaneseq
            %v713 = vshrl.u32 %v712, 7
            %v714 = vsub.s32 0, %v713
            %v715 = vrot.slane %v677, %v714
            %v717 = vsub.f32 %v695, %v715
            %v718 = vsub.f32 %v696, %v715
            %v719 = vsub.f32 %v697, %v715
            %v720 = vsub.f32 %v698, %v715
            %v721 = vsub.f32 %v699, %v715
            %v722 = vsub.f32 %v700, %v715
            %v723 = vsub.f32 %v701, %v715
            %v724 = vsub.f32 %v702, %v715
            %v725 = vsub.f32 %v703, %v715
            %v726 = vsub.f32 %v704, %v715
            %v727 = vsub.f32 %v705, %v715
            %v728 = vsub.f32 %v706, %v715
            %v729 = vsub.f32 %v707, %v715
            %v730 = vsub.f32 %v708, %v715
            %v731 = vsub.f32 %v709, %v715
            %v732 = vsub.f32 %v710, %v715
            %v733 = vadd.f32 %v682, 1e-05
            %v734 = vrsqrt.pop %v733
            %v736 = vlaneseq
            %v737 = vshrl.u32 %v736, 7
            %v738 = vsub.s32 0, %v737
            %v739 = vrot.slane %v734, %v738
            %v741 = vmul.f32 %v717, %v739
            %v742 = vmul.f32 %v718, %v739
            %v743 = vmul.f32 %v719, %v739
            %v744 = vmul.f32 %v720, %v739
            %v745 = vmul.f32 %v721, %v739
            %v746 = vmul.f32 %v722, %v739
            %v747 = vmul.f32 %v723, %v739
            %v748 = vmul.f32 %v724, %v739
            %v749 = vmul.f32 %v725, %v739
            %v750 = vmul.f32 %v726, %v739
            %v751 = vmul.f32 %v727, %v739
            %v752 = vmul.f32 %v728, %v739
            %v753 = vmul.f32 %v729, %v739
            %v754 = vmul.f32 %v730, %v739
            %v755 = vmul.f32 %v731, %v739
            %v756 = vmul.f32 %v732, %v739
            %v757 = vadd.f32 %v741, 0.0001
            %v758 = vadd.f32 %v742, 0.0001
            %v759 = vadd.f32 %v743, 0.0001
            %v760 = vadd.f32 %v744, 0.0001
            %v761 = vadd.f32 %v745, 0.0001
            %v762 = vadd.f32 %v746, 0.0001
            %v763 = vadd.f32 %v747, 0.0001
            %v764 = vadd.f32 %v748, 0.0001
            %v765 = vadd.f32 %v749, 0.0001
            %v766 = vadd.f32 %v750, 0.0001
            %v767 = vadd.f32 %v751, 0.0001
            %v768 = vadd.f32 %v752, 0.0001
            %v769 = vadd.f32 %v753, 0.0001
            %v770 = vadd.f32 %v754, 0.0001
            %v771 = vadd.f32 %v755, 0.0001
            %v772 = vadd.f32 %v756, 0.0001
            %v773 = vld [vmem:[%s452] sm:$0xff]
            %v774 = vld [vmem:[%s452 + $0x8] sm:$0xff]
            %v775 = vld [vmem:[%s452 + $0x10] sm:$0xff]
            %v776 = vld [vmem:[%s452 + $0x18] sm:$0xff]
            %v777 = vld [vmem:[%s452 + $0x20] sm:$0xff]
            %v778 = vld [vmem:[%s452 + $0x28] sm:$0xff]
            %v779 = vld [vmem:[%s452 + $0x30] sm:$0xff]
            %v780 = vld [vmem:[%s452 + $0x38] sm:$0xff]
            %v781 = vld [vmem:[%s452 + $0x40] sm:$0xff]
            %v782 = vld [vmem:[%s452 + $0x48] sm:$0xff]
            %v783 = vld [vmem:[%s452 + $0x50] sm:$0xff]
            %v784 = vld [vmem:[%s452 + $0x58] sm:$0xff]
            %v785 = vld [vmem:[%s452 + $0x60] sm:$0xff]
            %v786 = vld [vmem:[%s452 + $0x68] sm:$0xff]
            %v787 = vld [vmem:[%s452 + $0x70] sm:$0xff]
            %v788 = vld [vmem:[%s452 + $0x78] sm:$0xff]
            %789 = vmatprep.subr.mxu0 0.0
            %790 = vmatpush1.msra.mxu0 %v773
            %791 = vmatprep.subr.mxu0 0.0
            %792 = vmatpush1.msra.mxu0 %v774
            %793 = vmatprep.subr.mxu0 0.0
            %794 = vmatpush1.msra.mxu0 %v775
            %795 = vmatprep.subr.mxu0 0.0
            %796 = vmatpush1.msra.mxu0 %v776
            %797 = vmatprep.subr.mxu0 0.0
            %798 = vmatpush1.msra.mxu0 %v777
            %799 = vmatprep.subr.mxu0 0.0
            %800 = vmatpush1.msra.mxu0 %v778
            %801 = vmatprep.subr.mxu0 0.0
            %802 = vmatpush1.msra.mxu0 %v779
            %803 = vmatprep.subr.mxu0 0.0
            %804 = vmatpush1.msra.mxu0 %v780
            %805 = vmatprep.subr.mxu0 0.0
            %806 = vmatpush1.msra.mxu0 %v781
            %807 = vmatprep.subr.mxu0 0.0
            %808 = vmatpush1.msra.mxu0 %v782
            %809 = vmatprep.subr.mxu0 0.0
            %810 = vmatpush1.msra.mxu0 %v783
            %811 = vmatprep.subr.mxu0 0.0
            %812 = vmatpush1.msra.mxu0 %v784
            %813 = vmatprep.subr.mxu0 0.0
            %814 = vmatpush1.msra.mxu0 %v785
            %815 = vmatprep.subr.mxu0 0.0
            %816 = vmatpush1.msra.mxu0 %v786
            %817 = vmatprep.subr.mxu0 0.0
            %818 = vmatpush1.msra.mxu0 %v787
            %819 = vmatprep.subr.mxu0 0.0
            %820 = vmatpush1.msra.mxu0 %v788
            %821 = vmatprep.subr.mxu0 0.0
            %822 = vmatpush1.msra.mxu0 0.0
            %823 = vmatprep.subr.mxu0 0.0
            %824 = vmatpush1.msra.mxu0 0.0
            %825 = vmatprep.subr.mxu0 0.0
            %826 = vmatpush1.msra.mxu0 0.0
            %827 = vmatprep.subr.mxu0 0.0
            %828 = vmatpush1.msra.mxu0 0.0
            %829 = vmatprep.subr.mxu0 0.0
            %830 = vmatpush1.msra.mxu0 0.0
            %831 = vmatprep.subr.mxu0 0.0
            %832 = vmatpush1.msra.mxu0 0.0
            %833 = vmatprep.subr.mxu0 0.0
            %834 = vmatpush1.msra.mxu0 0.0
            %835 = vmatprep.subr.mxu0 0.0
            %836 = vmatpush1.msra.mxu0 0.0
            %837 = vmatprep.subr.mxu0 0.0
            %838 = vmatpush1.msra.mxu0 0.0
            %839 = vmatprep.subr.mxu0 0.0
            %840 = vmatpush1.msra.mxu0 0.0
            %841 = vmatprep.subr.mxu0 0.0
            %842 = vmatpush1.msra.mxu0 0.0
            %843 = vmatprep.subr.mxu0 0.0
            %844 = vmatpush1.msra.mxu0 0.0
            %845 = vmatprep.subr.mxu0 0.0
            %846 = vmatpush1.msra.mxu0 0.0
            %847 = vmatprep.subr.mxu0 0.0
            %848 = vmatpush1.msra.mxu0 0.0
            %849 = vmatprep.subr.mxu0 0.0
            %850 = vmatpush1.msra.mxu0 0.0
            %851 = vmatprep.subr.mxu0 0.0
            %852 = vmatpush1.msra.mxu0 0.0
            %853 = vmatprep.mubr.f32.mxu0 0.0
            %854 = vmatmul.mubr.f32.gmra.mrb[0].mxu0 %v757
            %v855 = vpop.f32.mrb[0].mxu0
            %v856 = vadd.f32 0.0, %v855
            %v857 = vpop.f32.mrb[0].mxu0
            %858 = vmatprep.mubr.f32.mxu0 0.0
            %859 = vmatmul.mubr.f32.gmra.mrb[0].mxu0 %v758
            %v860 = vpop.f32.mrb[0].mxu0
            %v861 = vadd.f32 0.0, %v860
            %v862 = vpop.f32.mrb[0].mxu0
            %863 = vmatprep.mubr.f32.mxu0 0.0
            %864 = vmatmul.mubr.f32.gmra.mrb[0].mxu0 %v759
            %v865 = vpop.f32.mrb[0].mxu0
            %v866 = vadd.f32 0.0, %v865
            %v867 = vpop.f32.mrb[0].mxu0
            %868 = vmatprep.mubr.f32.mxu0 0.0
            %869 = vmatmul.mubr.f32.gmra.mrb[0].mxu0 %v760
            %v870 = vpop.f32.mrb[0].mxu0
            %v871 = vadd.f32 0.0, %v870
            %v872 = vpop.f32.mrb[0].mxu0
            %873 = vmatprep.mubr.f32.mxu0 0.0
            %874 = vmatmul.mubr.f32.gmra.mrb[0].mxu0 %v761
            %v875 = vpop.f32.mrb[0].mxu0
            %v876 = vadd.f32 0.0, %v875
            %v877 = vpop.f32.mrb[0].mxu0
            %878 = vmatprep.mubr.f32.mxu0 0.0
            %879 = vmatmul.mubr.f32.gmra.mrb[0].mxu0 %v762
            %v880 = vpop.f32.mrb[0].mxu0
            %v881 = vadd.f32 0.0, %v880
            %v882 = vpop.f32.mrb[0].mxu0
            %883 = vmatprep.mubr.f32.mxu0 0.0
            %884 = vmatmul.mubr.f32.gmra.mrb[0].mxu0 %v763
            %v885 = vpop.f32.mrb[0].mxu0
            %v886 = vadd.f32 0.0, %v885
            %v887 = vpop.f32.mrb[0].mxu0
            %888 = vmatprep.mubr.f32.mxu0 0.0
            %889 = vmatmul.mubr.f32.gmra.mrb[0].mxu0 %v764
            %v890 = vpop.f32.mrb[0].mxu0
            %v891 = vadd.f32 0.0, %v890
            %v892 = vpop.f32.mrb[0].mxu0
            %893 = vmatprep.mubr.f32.mxu0 0.0
            %894 = vmatmul.mubr.f32.gmra.mrb[0].mxu0 %v765
            %v895 = vpop.f32.mrb[0].mxu0
            %v896 = vadd.f32 0.0, %v895
            %v897 = vpop.f32.mrb[0].mxu0
            %898 = vmatprep.mubr.f32.mxu0 0.0
            %899 = vmatmul.mubr.f32.gmra.mrb[0].mxu0 %v766
            %v900 = vpop.f32.mrb[0].mxu0
            %v901 = vadd.f32 0.0, %v900
            %v902 = vpop.f32.mrb[0].mxu0
            %903 = vmatprep.mubr.f32.mxu0 0.0
            %904 = vmatmul.mubr.f32.gmra.mrb[0].mxu0 %v767
            %v905 = vpop.f32.mrb[0].mxu0
            %v906 = vadd.f32 0.0, %v905
            %v907 = vpop.f32.mrb[0].mxu0
            %908 = vmatprep.mubr.f32.mxu0 0.0
            %909 = vmatmul.mubr.f32.gmra.mrb[0].mxu0 %v768
            %v910 = vpop.f32.mrb[0].mxu0
            %v911 = vadd.f32 0.0, %v910
            %v912 = vpop.f32.mrb[0].mxu0
            %913 = vmatprep.mubr.f32.mxu0 0.0
            %914 = vmatmul.mubr.f32.gmra.mrb[0].mxu0 %v769
            %v915 = vpop.f32.mrb[0].mxu0
            %v916 = vadd.f32 0.0, %v915
            %v917 = vpop.f32.mrb[0].mxu0
            %918 = vmatprep.mubr.f32.mxu0 0.0
            %919 = vmatmul.mubr.f32.gmra.mrb[0].mxu0 %v770
            %v920 = vpop.f32.mrb[0].mxu0
            %v921 = vadd.f32 0.0, %v920
            %v922 = vpop.f32.mrb[0].mxu0
            %923 = vmatprep.mubr.f32.mxu0 0.0
            %924 = vmatmul.mubr.f32.gmra.mrb[0].mxu0 %v771
            %v925 = vpop.f32.mrb[0].mxu0
            %v926 = vadd.f32 0.0, %v925
            %v927 = vpop.f32.mrb[0].mxu0
            %928 = vmatprep.mubr.f32.mxu0 0.0
            %929 = vmatmul.mubr.f32.gmra.mrb[0].mxu0 %v772
            %v930 = vpop.f32.mrb[0].mxu0
            %v931 = vadd.f32 0.0, %v930
            %v932 = vpop.f32.mrb[0].mxu0
            %933 = vdwg.mxu0
            %v934 = vpack.c.bf16 %v861, %v856
            %v935 = vpack.c.bf16 %v871, %v866
            %v936 = vpack.c.bf16 %v881, %v876
            %v937 = vpack.c.bf16 %v891, %v886
            %v938 = vpack.c.bf16 %v901, %v896
            %v939 = vpack.c.bf16 %v911, %v906
            %v940 = vpack.c.bf16 %v921, %v916
            %v941 = vpack.c.bf16 %v931, %v926
            %s942 = smul.addr %s683, 8
            %s943 = scalar_lea.vmem [#allocation3], %s942
            %944 = vst [vmem:[%s943] sm:$0xff] %v934
            %945 = vst [vmem:[%s943 + $0x8] sm:$0xff] %v935
            %946 = vst [vmem:[%s943 + $0x10] sm:$0xff] %v936
            %947 = vst [vmem:[%s943 + $0x18] sm:$0xff] %v937
            %948 = vst [vmem:[%s943 + $0x20] sm:$0xff] %v938
            %949 = vst [vmem:[%s943 + $0x28] sm:$0xff] %v939
            %950 = vst [vmem:[%s943 + $0x30] sm:$0xff] %v940
            %951 = vst [vmem:[%s943 + $0x38] sm:$0xff] %v941
          $region72: #{resgcn_forward.1} parent=63 // pred_fallthru
            _
        $region64: #{resgcn_forward.1} parent=55 // pred_fallthru
          _
        // Predicated region
        $region73: #{resgcn_forward.1} parent=55 // pred_check
          %p952 = pneg %p459
        $region74: #{resgcn_forward.1} parent=55 // pred_check_branch
          %954 = sbr.rel (%p952) target = $region76
        $region75: #{resgcn_forward.1} parent=55 // pred_region
          %955 = vst [vmem:[#allocation4] sm:$0xff] 0.0
          %956 = vst [vmem:[#allocation4 + $0x8] sm:$0xff] 0.0
          %957 = vst [vmem:[#allocation4 + $0x10] sm:$0xff] 0.0
          %958 = vst [vmem:[#allocation4 + $0x18] sm:$0xff] 0.0
          %959 = vst [vmem:[#allocation4 + $0x20] sm:$0xff] 0.0
          %960 = vst [vmem:[#allocation4 + $0x28] sm:$0xff] 0.0
          %961 = vst [vmem:[#allocation4 + $0x30] sm:$0xff] 0.0
          %962 = vst [vmem:[#allocation4 + $0x38] sm:$0xff] 0.0
          %963 = vst [vmem:[#allocation4 + $0x40] sm:$0xff] 0.0
          %964 = vst [vmem:[#allocation4 + $0x48] sm:$0xff] 0.0
          %965 = vst [vmem:[#allocation4 + $0x50] sm:$0xff] 0.0
          %966 = vst [vmem:[#allocation4 + $0x58] sm:$0xff] 0.0
          %967 = vst [vmem:[#allocation4 + $0x60] sm:$0xff] 0.0
          %968 = vst [vmem:[#allocation4 + $0x68] sm:$0xff] 0.0
          %969 = vst [vmem:[#allocation4 + $0x70] sm:$0xff] 0.0
          %970 = vst [vmem:[#allocation4 + $0x78] sm:$0xff] 0.0
        $region76: #{resgcn_forward.1} parent=55 // pred_fallthru
          _
        %v971 = vld [vmem:[#allocation4] sm:$0xff]
        %v972 = vld [vmem:[#allocation4 + $0x8] sm:$0xff]
        %v973 = vld [vmem:[#allocation4 + $0x10] sm:$0xff]
        %v974 = vld [vmem:[#allocation4 + $0x18] sm:$0xff]
        %v975 = vld [vmem:[#allocation4 + $0x20] sm:$0xff]
        %v976 = vld [vmem:[#allocation4 + $0x28] sm:$0xff]
        %v977 = vld [vmem:[#allocation4 + $0x30] sm:$0xff]
        %v978 = vld [vmem:[#allocation4 + $0x38] sm:$0xff]
        %v979 = vld [vmem:[#allocation4 + $0x40] sm:$0xff]
        %v980 = vld [vmem:[#allocation4 + $0x48] sm:$0xff]
        %v981 = vld [vmem:[#allocation4 + $0x50] sm:$0xff]
        %v982 = vld [vmem:[#allocation4 + $0x58] sm:$0xff]
        %v983 = vld [vmem:[#allocation4 + $0x60] sm:$0xff]
        %v984 = vld [vmem:[#allocation4 + $0x68] sm:$0xff]
        %v985 = vld [vmem:[#allocation4 + $0x70] sm:$0xff]
        %v986 = vld [vmem:[#allocation4 + $0x78] sm:$0xff]
        %v987 = vld [vmem:[%s443] sm:$0xf]
        %v988 = vld [vmem:[%s443 + $0x4] sm:$0xf]
        %v989 = vld [vmem:[%s443 + $0x8] sm:$0xf]
        %v990 = vld [vmem:[%s443 + $0xc] sm:$0xf]
        %v991 = vld [vmem:[%s443 + $0x10] sm:$0xf]
        %v992 = vld [vmem:[%s443 + $0x14] sm:$0xf]
        %v993 = vld [vmem:[%s443 + $0x18] sm:$0xf]
        %v994 = vld [vmem:[%s443 + $0x1c] sm:$0xf]
        %v995 = vld [vmem:[%s443 + $0x20] sm:$0xf]
        %v996 = vld [vmem:[%s443 + $0x24] sm:$0xf]
        %v997 = vld [vmem:[%s443 + $0x28] sm:$0xf]
        %v998 = vld [vmem:[%s443 + $0x2c] sm:$0xf]
        %v999 = vld [vmem:[%s443 + $0x30] sm:$0xf]
        %v1000 = vld [vmem:[%s443 + $0x34] sm:$0xf]
        %v1001 = vld [vmem:[%s443 + $0x38] sm:$0xf]
        %v1002 = vld [vmem:[%s443 + $0x3c] sm:$0xf]
        %s1003 = sshra.s32 %s468, 4
        %s1004 = sand.u32 %s468, 15
        %s1005 = smul.addr %s1003, 8
        %s1006 = scalar_lea.vmem [#allocation3], %s1005
        %v1007 = vld [vmem:[%s1006] sm:$0xff]
        %v1008 = vld [vmem:[%s1006 + $0x8] sm:$0xff]
        %v1009 = vld [vmem:[%s1006 + $0x10] sm:$0xff]
        %v1010 = vld [vmem:[%s1006 + $0x18] sm:$0xff]
        %v1011 = vld [vmem:[%s1006 + $0x20] sm:$0xff]
        %v1012 = vld [vmem:[%s1006 + $0x28] sm:$0xff]
        %v1013 = vld [vmem:[%s1006 + $0x30] sm:$0xff]
        %v1014 = vld [vmem:[%s1006 + $0x38] sm:$0xff]
        %v1031 = vunpack.c.l.b16 %v987
        %v1032 = vunpack.c.l.b16 %v988
        %v1033 = vunpack.c.l.b16 %v989
        %v1034 = vunpack.c.l.b16 %v990
        %v1035 = vunpack.c.l.b16 %v991
        %v1036 = vunpack.c.l.b16 %v992
        %v1037 = vunpack.c.l.b16 %v993
        %v1038 = vunpack.c.l.b16 %v994
        %v1039 = vunpack.c.l.b16 %v995
        %v1040 = vunpack.c.l.b16 %v996
        %v1041 = vunpack.c.l.b16 %v997
        %v1042 = vunpack.c.l.b16 %v998
        %v1043 = vunpack.c.l.b16 %v999
        %v1044 = vunpack.c.l.b16 %v1000
        %v1045 = vunpack.c.l.b16 %v1001
        %v1046 = vunpack.c.l.b16 %v1002
        %v1047 = vpack.c.b16 %v1032, %v1031
        %v1048 = vpack.c.b16 %v1034, %v1033
        %v1049 = vpack.c.b16 %v1036, %v1035
        %v1050 = vpack.c.b16 %v1038, %v1037
        %v1051 = vpack.c.b16 %v1040, %v1039
        %v1052 = vpack.c.b16 %v1042, %v1041
        %v1053 = vpack.c.b16 %v1044, %v1043
        %v1054 = vpack.c.b16 %v1046, %v1045
        %1063 = vmatprep.subr.bf16.mxu0 0
        %1064 = vmatpush1.bf16.msra.mxu0 %v1007
        %1065 = vmatprep.subr.bf16.mxu0 0
        %1066 = vmatpush1.bf16.msra.mxu0 %v1008
        %1067 = vmatprep.subr.bf16.mxu0 0
        %1068 = vmatpush1.bf16.msra.mxu0 %v1009
        %1069 = vmatprep.subr.bf16.mxu0 0
        %1070 = vmatpush1.bf16.msra.mxu0 %v1010
        %1071 = vmatprep.subr.bf16.mxu0 0
        %1072 = vmatpush1.bf16.msra.mxu0 %v1011
        %1073 = vmatprep.subr.bf16.mxu0 0
        %1074 = vmatpush1.bf16.msra.mxu0 %v1012
        %1075 = vmatprep.subr.bf16.mxu0 0
        %1076 = vmatpush1.bf16.msra.mxu0 %v1013
        %1077 = vmatprep.subr.bf16.mxu0 0
        %1078 = vmatpush1.bf16.msra.mxu0 %v1014
        %1079 = vmatprep.subr.bf16.mxu0 0
        %1080 = vmatpush1.bf16.msra.mxu0 0
        %1081 = vmatprep.subr.bf16.mxu0 0
        %1082 = vmatpush1.bf16.msra.mxu0 0
        %1083 = vmatprep.subr.bf16.mxu0 0
        %1084 = vmatpush1.bf16.msra.mxu0 0
        %1085 = vmatprep.subr.bf16.mxu0 0
        %1086 = vmatpush1.bf16.msra.mxu0 0
        %1087 = vmatprep.subr.bf16.mxu0 0
        %1088 = vmatpush1.bf16.msra.mxu0 0
        %1089 = vmatprep.subr.bf16.mxu0 0
        %1090 = vmatpush1.bf16.msra.mxu0 0
        %1091 = vmatprep.subr.bf16.mxu0 0
        %1092 = vmatpush1.bf16.msra.mxu0 0
        %1093 = vmatprep.subr.bf16.mxu0 0
        %1094 = vmatpush1.bf16.msra.mxu0 0
        %1095 = vmatprep.mubr.bf16.mxu0 0
        %1096 = vmatmul.mubr.bf16.gmra.mrb[0].mxu0 %v1047
        %v1097 = vpop.f32.mrb[0].mxu0
        %v1098 = vadd.f32 0.0, %v1097
        %v1099 = vpop.f32.mrb[0].mxu0
        %v1100 = vpop.f32.mrb[0].mxu0
        %v1101 = vadd.f32 0.0, %v1100
        %v1102 = vpop.f32.mrb[0].mxu0
        %1103 = vmatprep.mubr.bf16.mxu0 0
        %1104 = vmatmul.mubr.bf16.gmra.mrb[0].mxu0 %v1048
        %v1105 = vpop.f32.mrb[0].mxu0
        %v1106 = vadd.f32 0.0, %v1105
        %v1107 = vpop.f32.mrb[0].mxu0
        %v1108 = vpop.f32.mrb[0].mxu0
        %v1109 = vadd.f32 0.0, %v1108
        %v1110 = vpop.f32.mrb[0].mxu0
        %1111 = vmatprep.mubr.bf16.mxu0 0
        %1112 = vmatmul.mubr.bf16.gmra.mrb[0].mxu0 %v1049
        %v1113 = vpop.f32.mrb[0].mxu0
        %v1114 = vadd.f32 0.0, %v1113
        %v1115 = vpop.f32.mrb[0].mxu0
        %v1116 = vpop.f32.mrb[0].mxu0
        %v1117 = vadd.f32 0.0, %v1116
        %v1118 = vpop.f32.mrb[0].mxu0
        %1119 = vmatprep.mubr.bf16.mxu0 0
        %1120 = vmatmul.mubr.bf16.gmra.mrb[0].mxu0 %v1050
        %v1121 = vpop.f32.mrb[0].mxu0
        %v1122 = vadd.f32 0.0, %v1121
        %v1123 = vpop.f32.mrb[0].mxu0
        %v1124 = vpop.f32.mrb[0].mxu0
        %v1125 = vadd.f32 0.0, %v1124
        %v1126 = vpop.f32.mrb[0].mxu0
        %1127 = vmatprep.mubr.bf16.mxu0 0
        %1128 = vmatmul.mubr.bf16.gmra.mrb[0].mxu0 %v1051
        %v1129 = vpop.f32.mrb[0].mxu0
        %v1130 = vadd.f32 0.0, %v1129
        %v1131 = vpop.f32.mrb[0].mxu0
        %v1132 = vpop.f32.mrb[0].mxu0
        %v1133 = vadd.f32 0.0, %v1132
        %v1134 = vpop.f32.mrb[0].mxu0
        %1135 = vmatprep.mubr.bf16.mxu0 0
        %1136 = vmatmul.mubr.bf16.gmra.mrb[0].mxu0 %v1052
        %v1137 = vpop.f32.mrb[0].mxu0
        %v1138 = vadd.f32 0.0, %v1137
        %v1139 = vpop.f32.mrb[0].mxu0
        %v1140 = vpop.f32.mrb[0].mxu0
        %v1141 = vadd.f32 0.0, %v1140
        %v1142 = vpop.f32.mrb[0].mxu0
        %1143 = vmatprep.mubr.bf16.mxu0 0
        %1144 = vmatmul.mubr.bf16.gmra.mrb[0].mxu0 %v1053
        %v1145 = vpop.f32.mrb[0].mxu0
        %v1146 = vadd.f32 0.0, %v1145
        %v1147 = vpop.f32.mrb[0].mxu0
        %v1148 = vpop.f32.mrb[0].mxu0
        %v1149 = vadd.f32 0.0, %v1148
        %v1150 = vpop.f32.mrb[0].mxu0
        %1151 = vmatprep.mubr.bf16.mxu0 0
        %1152 = vmatmul.mubr.bf16.gmra.mrb[0].mxu0 %v1054
        %v1153 = vpop.f32.mrb[0].mxu0
        %v1154 = vadd.f32 0.0, %v1153
        %v1155 = vpop.f32.mrb[0].mxu0
        %v1156 = vpop.f32.mrb[0].mxu0
        %v1157 = vadd.f32 0.0, %v1156
        %v1158 = vpop.f32.mrb[0].mxu0
        %1159 = vdwg.mxu0
        %v1160 = vadd.f32 %v971, %v1098
        %v1161 = vadd.f32 %v972, %v1101
        %v1162 = vadd.f32 %v973, %v1106
        %v1163 = vadd.f32 %v974, %v1109
        %v1164 = vadd.f32 %v975, %v1114
        %v1165 = vadd.f32 %v976, %v1117
        %v1166 = vadd.f32 %v977, %v1122
        %v1167 = vadd.f32 %v978, %v1125
        %v1168 = vadd.f32 %v979, %v1130
        %v1169 = vadd.f32 %v980, %v1133
        %v1170 = vadd.f32 %v981, %v1138
        %v1171 = vadd.f32 %v982, %v1141
        %v1172 = vadd.f32 %v983, %v1146
        %v1173 = vadd.f32 %v984, %v1149
        %v1174 = vadd.f32 %v985, %v1154
        %v1175 = vadd.f32 %v986, %v1157
        %1176 = vst [vmem:[#allocation4] sm:$0xff] %v1160
        %1177 = vst [vmem:[#allocation4 + $0x8] sm:$0xff] %v1161
        %1178 = vst [vmem:[#allocation4 + $0x10] sm:$0xff] %v1162
        %1179 = vst [vmem:[#allocation4 + $0x18] sm:$0xff] %v1163
        %1180 = vst [vmem:[#allocation4 + $0x20] sm:$0xff] %v1164
        %1181 = vst [vmem:[#allocation4 + $0x28] sm:$0xff] %v1165
        %1182 = vst [vmem:[#allocation4 + $0x30] sm:$0xff] %v1166
        %1183 = vst [vmem:[#allocation4 + $0x38] sm:$0xff] %v1167
        %1184 = vst [vmem:[#allocation4 + $0x40] sm:$0xff] %v1168
        %1185 = vst [vmem:[#allocation4 + $0x48] sm:$0xff] %v1169
        %1186 = vst [vmem:[#allocation4 + $0x50] sm:$0xff] %v1170
        %1187 = vst [vmem:[#allocation4 + $0x58] sm:$0xff] %v1171
        %1188 = vst [vmem:[#allocation4 + $0x60] sm:$0xff] %v1172
        %1189 = vst [vmem:[#allocation4 + $0x68] sm:$0xff] %v1173
        %1190 = vst [vmem:[#allocation4 + $0x70] sm:$0xff] %v1174
        %1191 = vst [vmem:[#allocation4 + $0x78] sm:$0xff] %v1175
        // Predicated region
        $region77: #{resgcn_forward.1} parent=55 // pred_check
          %p1192 = pneg %p459
        $region78: #{resgcn_forward.1} parent=55 // pred_check_branch
          %1194 = sbr.rel (%p1192) target = $region80
        $region79: #{resgcn_forward.1} parent=55 // pred_region
          %v1195 = vld [vmem:[#allocation4] sm:$0xff]
          %v1196 = vld [vmem:[#allocation4 + $0x8] sm:$0xff]
          %v1197 = vld [vmem:[#allocation4 + $0x10] sm:$0xff]
          %v1198 = vld [vmem:[#allocation4 + $0x18] sm:$0xff]
          %v1199 = vld [vmem:[#allocation4 + $0x20] sm:$0xff]
          %v1200 = vld [vmem:[#allocation4 + $0x28] sm:$0xff]
          %v1201 = vld [vmem:[#allocation4 + $0x30] sm:$0xff]
          %v1202 = vld [vmem:[#allocation4 + $0x38] sm:$0xff]
          %v1203 = vld [vmem:[#allocation4 + $0x40] sm:$0xff]
          %v1204 = vld [vmem:[#allocation4 + $0x48] sm:$0xff]
          %v1205 = vld [vmem:[#allocation4 + $0x50] sm:$0xff]
          %v1206 = vld [vmem:[#allocation4 + $0x58] sm:$0xff]
          %v1207 = vld [vmem:[#allocation4 + $0x60] sm:$0xff]
          %v1208 = vld [vmem:[#allocation4 + $0x68] sm:$0xff]
          %v1209 = vld [vmem:[#allocation4 + $0x70] sm:$0xff]
          %v1210 = vld [vmem:[#allocation4 + $0x78] sm:$0xff]
          %v1211 = vld [vmem:[%s455] sm:$0x1]
          %v1213 = vlaneseq
          %v1214 = vshrl.u32 %v1213, 7
          %v1215 = vsub.s32 0, %v1214
          %v1216 = vrot.slane %v1211, %v1215
          %v1218 = vadd.f32 %v1195, %v1216
          %v1219 = vadd.f32 %v1196, %v1216
          %v1220 = vadd.f32 %v1197, %v1216
          %v1221 = vadd.f32 %v1198, %v1216
          %v1222 = vadd.f32 %v1199, %v1216
          %v1223 = vadd.f32 %v1200, %v1216
          %v1224 = vadd.f32 %v1201, %v1216
          %v1225 = vadd.f32 %v1202, %v1216
          %v1226 = vadd.f32 %v1203, %v1216
          %v1227 = vadd.f32 %v1204, %v1216
          %v1228 = vadd.f32 %v1205, %v1216
          %v1229 = vadd.f32 %v1206, %v1216
          %v1230 = vadd.f32 %v1207, %v1216
          %v1231 = vadd.f32 %v1208, %v1216
          %v1232 = vadd.f32 %v1209, %v1216
          %v1233 = vadd.f32 %v1210, %v1216
          %v1234 = vmax.f32 %v1218, 0.0
          %v1235 = vmax.f32 %v1219, 0.0
          %v1236 = vmax.f32 %v1220, 0.0
          %v1237 = vmax.f32 %v1221, 0.0
          %v1238 = vmax.f32 %v1222, 0.0
          %v1239 = vmax.f32 %v1223, 0.0
          %v1240 = vmax.f32 %v1224, 0.0
          %v1241 = vmax.f32 %v1225, 0.0
          %v1242 = vmax.f32 %v1226, 0.0
          %v1243 = vmax.f32 %v1227, 0.0
          %v1244 = vmax.f32 %v1228, 0.0
          %v1245 = vmax.f32 %v1229, 0.0
          %v1246 = vmax.f32 %v1230, 0.0
          %v1247 = vmax.f32 %v1231, 0.0
          %v1248 = vmax.f32 %v1232, 0.0
          %v1249 = vmax.f32 %v1233, 0.0
          %s1250 = smul.u32 %s27, 128
          %v1251 = vlaneseq
          %v1252 = vshrl.u32 %v1251, 7
          %v1253 = vadd.s32 %v1252, 8
          %v1254 = vadd.s32 %v1252, 16
          %v1255 = vadd.s32 %v1252, 24
          %v1256 = vadd.s32 %v1252, 32
          %v1257 = vadd.s32 %v1252, 40
          %v1258 = vadd.s32 %v1252, 48
          %v1259 = vadd.s32 %v1252, 56
          %v1260 = vadd.s32 %v1252, 64
          %v1261 = vadd.s32 %v1252, 72
          %v1262 = vadd.s32 %v1252, 80
          %v1263 = vadd.s32 %v1252, 88
          %v1264 = vadd.s32 %v1252, 96
          %v1265 = vadd.s32 %v1252, 104
          %v1266 = vadd.s32 %v1252, 112
          %v1267 = vadd.s32 %v1252, 120
          %v1268 = vstv %s1250
          %v1269 = vadd.s32 %v1268, %v1252
          %v1270 = vadd.s32 %v1268, %v1253
          %v1271 = vadd.s32 %v1268, %v1254
          %v1272 = vadd.s32 %v1268, %v1255
          %v1273 = vadd.s32 %v1268, %v1256
          %v1274 = vadd.s32 %v1268, %v1257
          %v1275 = vadd.s32 %v1268, %v1258
          %v1276 = vadd.s32 %v1268, %v1259
          %v1277 = vadd.s32 %v1268, %v1260
          %v1278 = vadd.s32 %v1268, %v1261
          %v1279 = vadd.s32 %v1268, %v1262
          %v1280 = vadd.s32 %v1268, %v1263
          %v1281 = vadd.s32 %v1268, %v1264
          %v1282 = vadd.s32 %v1268, %v1265
          %v1283 = vadd.s32 %v1268, %v1266
          %v1284 = vadd.s32 %v1268, %v1267
          %vm1285 = vcmp.lt.s32.totalorder %v1269, 16
          %vm1286 = vcmp.lt.s32.totalorder %v1270, 16
          %vm1287 = vcmp.lt.s32.totalorder %v1271, 16
          %vm1288 = vcmp.lt.s32.totalorder %v1272, 16
          %vm1289 = vcmp.lt.s32.totalorder %v1273, 16
          %vm1290 = vcmp.lt.s32.totalorder %v1274, 16
          %vm1291 = vcmp.lt.s32.totalorder %v1275, 16
          %vm1292 = vcmp.lt.s32.totalorder %v1276, 16
          %vm1293 = vcmp.lt.s32.totalorder %v1277, 16
          %vm1294 = vcmp.lt.s32.totalorder %v1278, 16
          %vm1295 = vcmp.lt.s32.totalorder %v1279, 16
          %vm1296 = vcmp.lt.s32.totalorder %v1280, 16
          %vm1297 = vcmp.lt.s32.totalorder %v1281, 16
          %vm1298 = vcmp.lt.s32.totalorder %v1282, 16
          %vm1299 = vcmp.lt.s32.totalorder %v1283, 16
          %vm1300 = vcmp.lt.s32.totalorder %v1284, 16
          %v1301 = vsel %vm1285, 1, 0
          %v1302 = vsel %vm1286, 1, 0
          %v1303 = vsel %vm1287, 1, 0
          %v1304 = vsel %vm1288, 1, 0
          %v1305 = vsel %vm1289, 1, 0
          %v1306 = vsel %vm1290, 1, 0
          %v1307 = vsel %vm1291, 1, 0
          %v1308 = vsel %vm1292, 1, 0
          %v1309 = vsel %vm1293, 1, 0
          %v1310 = vsel %vm1294, 1, 0
          %v1311 = vsel %vm1295, 1, 0
          %v1312 = vsel %vm1296, 1, 0
          %v1313 = vsel %vm1297, 1, 0
          %v1314 = vsel %vm1298, 1, 0
          %v1315 = vsel %vm1299, 1, 0
          %v1316 = vsel %vm1300, 1, 0
          %v1317 = vcvt.s32.f32 %v1301
          %v1318 = vcvt.s32.f32 %v1302
          %v1319 = vcvt.s32.f32 %v1303
          %v1320 = vcvt.s32.f32 %v1304
          %v1321 = vcvt.s32.f32 %v1305
          %v1322 = vcvt.s32.f32 %v1306
          %v1323 = vcvt.s32.f32 %v1307
          %v1324 = vcvt.s32.f32 %v1308
          %v1325 = vcvt.s32.f32 %v1309
          %v1326 = vcvt.s32.f32 %v1310
          %v1327 = vcvt.s32.f32 %v1311
          %v1328 = vcvt.s32.f32 %v1312
          %v1329 = vcvt.s32.f32 %v1313
          %v1330 = vcvt.s32.f32 %v1314
          %v1331 = vcvt.s32.f32 %v1315
          %v1332 = vcvt.s32.f32 %v1316
          %v1333 = vmul.f32 %v1234, %v1317
          %v1334 = vmul.f32 %v1235, %v1318
          %v1335 = vmul.f32 %v1236, %v1319
          %v1336 = vmul.f32 %v1237, %v1320
          %v1337 = vmul.f32 %v1238, %v1321
          %v1338 = vmul.f32 %v1239, %v1322
          %v1339 = vmul.f32 %v1240, %v1323
          %v1340 = vmul.f32 %v1241, %v1324
          %v1341 = vmul.f32 %v1242, %v1325
          %v1342 = vmul.f32 %v1243, %v1326
          %v1343 = vmul.f32 %v1244, %v1327
          %v1344 = vmul.f32 %v1245, %v1328
          %v1345 = vmul.f32 %v1246, %v1329
          %v1346 = vmul.f32 %v1247, %v1330
          %v1347 = vmul.f32 %v1248, %v1331
          %v1348 = vmul.f32 %v1249, %v1332
          %v1349 = vpack.c.bf16 %v1334, %v1333
          %v1350 = vpack.c.bf16 %v1336, %v1335
          %v1351 = vpack.c.bf16 %v1338, %v1337
          %v1352 = vpack.c.bf16 %v1340, %v1339
          %v1353 = vpack.c.bf16 %v1342, %v1341
          %v1354 = vpack.c.bf16 %v1344, %v1343
          %v1355 = vpack.c.bf16 %v1346, %v1345
          %v1356 = vpack.c.bf16 %v1348, %v1347
          %s1357 = sshra.s32 %s1250, 4
          %s1358 = sand.u32 %s1250, 15
          %s1359 = smul.addr %s1357, 8
          %s1360 = scalar_lea.vmem [#allocation2], %s1359
          %1361 = vst [vmem:[%s1360] sm:$0xff] %v1349
          %1362 = vst [vmem:[%s1360 + $0x8] sm:$0xff] %v1350
          %1363 = vst [vmem:[%s1360 + $0x10] sm:$0xff] %v1351
          %1364 = vst [vmem:[%s1360 + $0x18] sm:$0xff] %v1352
          %1365 = vst [vmem:[%s1360 + $0x20] sm:$0xff] %v1353
          %1366 = vst [vmem:[%s1360 + $0x28] sm:$0xff] %v1354
          %1367 = vst [vmem:[%s1360 + $0x30] sm:$0xff] %v1355
          %1368 = vst [vmem:[%s1360 + $0x38] sm:$0xff] %v1356
          // Predicated region
          $region81: #{resgcn_forward.1} parent=79 // pred_check
            %p1369 = pneg %p458
          $region82: #{resgcn_forward.1} parent=79 // pred_check_branch
            %1371 = sbr.rel (%p1369) target = $region84
          $region83: #{resgcn_forward.1} parent=79 // pred_region
            %1372 = vst [vmem:[#allocation6] sm:$0x1] 0.0
            %1373 = vst [vmem:[#allocation7] sm:$0x1] 0.0
          $region84: #{resgcn_forward.1} parent=79 // pred_fallthru
            _
          %v1374 = vld [vmem:[#allocation6] sm:$0x1]
          %v1375 = vadd.f32 %v1333, %v1334
          %v1376 = vadd.f32 %v1375, %v1335
          %v1377 = vadd.f32 %v1376, %v1336
          %v1378 = vadd.f32 %v1377, %v1337
          %v1379 = vadd.f32 %v1378, %v1338
          %v1380 = vadd.f32 %v1379, %v1339
          %v1381 = vadd.f32 %v1380, %v1340
          %v1382 = vadd.f32 %v1381, %v1341
          %v1383 = vadd.f32 %v1382, %v1342
          %v1384 = vadd.f32 %v1383, %v1343
          %v1385 = vadd.f32 %v1384, %v1344
          %v1386 = vadd.f32 %v1385, %v1345
          %v1387 = vadd.f32 %v1386, %v1346
          %v1388 = vadd.f32 %v1387, %v1347
          %v1389 = vadd.f32 %v1388, %v1348
          %v1390 = vrot.slane %v1389, 4
          %v1391 = vadd.f32 %v1389, %v1390
          %v1392 = vrot.slane %v1391, 2
          %v1393 = vadd.f32 %v1391, %v1392
          %v1394 = vrot.slane %v1393, 1
          %v1395 = vadd.f32 %v1393, %v1394
          %v1396 = vadd.f32 %v1374, %v1395
          %1397 = vst [vmem:[#allocation6] sm:$0x1] %v1396
          %v1398 = vld [vmem:[#allocation7] sm:$0x1]
          %v1399 = vmul.f32 %v1333, %v1333
          %v1400 = vmul.f32 %v1334, %v1334
          %v1401 = vmul.f32 %v1335, %v1335
          %v1402 = vmul.f32 %v1336, %v1336
          %v1403 = vmul.f32 %v1337, %v1337
          %v1404 = vmul.f32 %v1338, %v1338
          %v1405 = vmul.f32 %v1339, %v1339
          %v1406 = vmul.f32 %v1340, %v1340
          %v1407 = vmul.f32 %v1341, %v1341
          %v1408 = vmul.f32 %v1342, %v1342
          %v1409 = vmul.f32 %v1343, %v1343
          %v1410 = vmul.f32 %v1344, %v1344
          %v1411 = vmul.f32 %v1345, %v1345
          %v1412 = vmul.f32 %v1346, %v1346
          %v1413 = vmul.f32 %v1347, %v1347
          %v1414 = vmul.f32 %v1348, %v1348
          %v1415 = vadd.f32 %v1399, %v1400
          %v1416 = vadd.f32 %v1415, %v1401
          %v1417 = vadd.f32 %v1416, %v1402
          %v1418 = vadd.f32 %v1417, %v1403
          %v1419 = vadd.f32 %v1418, %v1404
          %v1420 = vadd.f32 %v1419, %v1405
          %v1421 = vadd.f32 %v1420, %v1406
          %v1422 = vadd.f32 %v1421, %v1407
          %v1423 = vadd.f32 %v1422, %v1408
          %v1424 = vadd.f32 %v1423, %v1409
          %v1425 = vadd.f32 %v1424, %v1410
          %v1426 = vadd.f32 %v1425, %v1411
          %v1427 = vadd.f32 %v1426, %v1412
          %v1428 = vadd.f32 %v1427, %v1413
          %v1429 = vadd.f32 %v1428, %v1414
          %v1430 = vrot.slane %v1429, 4
          %v1431 = vadd.f32 %v1429, %v1430
          %v1432 = vrot.slane %v1431, 2
          %v1433 = vadd.f32 %v1431, %v1432
          %v1434 = vrot.slane %v1433, 1
          %v1435 = vadd.f32 %v1433, %v1434
          %v1436 = vadd.f32 %v1398, %v1435
          %1437 = vst [vmem:[#allocation7] sm:$0x1] %v1436
          %p1438 = scmp.eq.s32.totalorder %s26, 2
          // Predicated region
          $region85: #{resgcn_forward.1} parent=79 // pred_check
            %p1439 = pneg %p1438
          $region86: #{resgcn_forward.1} parent=79 // pred_check_branch
            %1441 = sbr.rel (%p1439) target = $region88
          $region87: #{resgcn_forward.1} parent=79 // pred_region
            %v1442 = vld [vmem:[#allocation5] sm:$0x3]
            %v1443 = vld [vmem:[%s447] sm:$0x1]
            %v1444 = vunpack.c.l.bf16 %v1443
            %1445 = vmatprep.subr.mxu0 0.0
            %1446 = vmatpush1.msra.mxu0 %v1333
            %1447 = vmatprep.subr.mxu0 0.0
            %1448 = vmatpush1.msra.mxu0 %v1334
            %1449 = vmatprep.subr.mxu0 0.0
            %1450 = vmatpush1.msra.mxu0 %v1335
            %1451 = vmatprep.subr.mxu0 0.0
            %1452 = vmatpush1.msra.mxu0 %v1336
            %1453 = vmatprep.subr.mxu0 0.0
            %1454 = vmatpush1.msra.mxu0 %v1337
            %1455 = vmatprep.subr.mxu0 0.0
            %1456 = vmatpush1.msra.mxu0 %v1338
            %1457 = vmatprep.subr.mxu0 0.0
            %1458 = vmatpush1.msra.mxu0 %v1339
            %1459 = vmatprep.subr.mxu0 0.0
            %1460 = vmatpush1.msra.mxu0 %v1340
            %1461 = vmatprep.subr.mxu0 0.0
            %1462 = vmatpush1.msra.mxu0 %v1341
            %1463 = vmatprep.subr.mxu0 0.0
            %1464 = vmatpush1.msra.mxu0 %v1342
            %1465 = vmatprep.subr.mxu0 0.0
            %1466 = vmatpush1.msra.mxu0 %v1343
            %1467 = vmatprep.subr.mxu0 0.0
            %1468 = vmatpush1.msra.mxu0 %v1344
            %1469 = vmatprep.subr.mxu0 0.0
            %1470 = vmatpush1.msra.mxu0 %v1345
            %1471 = vmatprep.subr.mxu0 0.0
            %1472 = vmatpush1.msra.mxu0 %v1346
            %1473 = vmatprep.subr.mxu0 0.0
            %1474 = vmatpush1.msra.mxu0 %v1347
            %1475 = vmatprep.subr.mxu0 0.0
            %1476 = vmatpush1.msra.mxu0 %v1348
            %1477 = vmatprep.subr.mxu0 0.0
            %1478 = vmatpush1.msra.mxu0 0.0
            %1479 = vmatprep.subr.mxu0 0.0
            %1480 = vmatpush1.msra.mxu0 0.0
            %1481 = vmatprep.subr.mxu0 0.0
            %1482 = vmatpush1.msra.mxu0 0.0
            %1483 = vmatprep.subr.mxu0 0.0
            %1484 = vmatpush1.msra.mxu0 0.0
            %1485 = vmatprep.subr.mxu0 0.0
            %1486 = vmatpush1.msra.mxu0 0.0
            %1487 = vmatprep.subr.mxu0 0.0
            %1488 = vmatpush1.msra.mxu0 0.0
            %1489 = vmatprep.subr.mxu0 0.0
            %1490 = vmatpush1.msra.mxu0 0.0
            %1491 = vmatprep.subr.mxu0 0.0
            %1492 = vmatpush1.msra.mxu0 0.0
            %1493 = vmatprep.subr.mxu0 0.0
            %1494 = vmatpush1.msra.mxu0 0.0
            %1495 = vmatprep.subr.mxu0 0.0
            %1496 = vmatpush1.msra.mxu0 0.0
            %1497 = vmatprep.subr.mxu0 0.0
            %1498 = vmatpush1.msra.mxu0 0.0
            %1499 = vmatprep.subr.mxu0 0.0
            %1500 = vmatpush1.msra.mxu0 0.0
            %1501 = vmatprep.subr.mxu0 0.0
            %1502 = vmatpush1.msra.mxu0 0.0
            %1503 = vmatprep.subr.mxu0 0.0
            %1504 = vmatpush1.msra.mxu0 0.0
            %1505 = vmatprep.subr.mxu0 0.0
            %1506 = vmatpush1.msra.mxu0 0.0
            %1507 = vmatprep.subr.mxu0 0.0
            %1508 = vmatpush1.msra.mxu0 0.0
            %1509 = vmatprep.mubr.f32.mxu0 0.0
            %1510 = vmatmul.mubr.f32.gmra.mrb[0].mxu0 %v1444
            %v1511 = vpop.f32.mrb[0].mxu0
            %v1512 = vadd.f32 0.0, %v1511
            %v1513 = vpop.f32.mrb[0].mxu0
            %1514 = vdwg.mxu0
            %v1515 = vadd.f32 %v1442, %v1512
            %1516 = vst [vmem:[#allocation5] sm:$0x3] %v1515
          $region88: #{resgcn_forward.1} parent=79 // pred_fallthru
            _
        $region80: #{resgcn_forward.1} parent=55 // pred_fallthru
          _
        %p1517 = scmp.eq.s32.totalorder %s26, 2
        %p1518 = pnand %p1517, %p461
        %p1519 = pneg %p1518
        // Predicated region
        $region89: #{resgcn_forward.1} parent=55 // pred_check
          _
        $region90: #{resgcn_forward.1} parent=55 // pred_check_branch
          %1521 = sbr.rel (%p1518) target = $region92
        $region91: #{resgcn_forward.1} parent=55 // pred_region
          %v1522 = vld [vmem:[#allocation5] sm:$0x3]
          %vm1523 = vcmask 1041408
          %v1524 = vsel %vm1523, %v1522, 0.0
          %v1525 = vrot.slane %v1524, 4
          %v1526 = vadd.f32 %v1524, %v1525
          %v1527 = vrot.slane %v1526, 2
          %v1528 = vadd.f32 %v1526, %v1527
          %v1529 = vrot.slane %v1528, 1
          %v1530 = vadd.f32 %v1528, %v1529
          %v1531 = vmul.f32 %v1530, 0.5
          %v1532 = vmul.f32 %v1522, %v1522
          %v1533 = vsel %vm1523, %v1532, 0.0
          %v1534 = vrot.slane %v1533, 4
          %v1535 = vadd.f32 %v1533, %v1534
          %v1536 = vrot.slane %v1535, 2
          %v1537 = vadd.f32 %v1535, %v1536
          %v1538 = vrot.slane %v1537, 1
          %v1539 = vadd.f32 %v1537, %v1538
          %v1540 = vmul.f32 %v1539, 0.5
          %v1541 = vmul.f32 %v1531, %v1531
          %v1542 = vsub.f32 %v1540, %v1541
          %v1543 = vmax.f32 %v1542, 0.0
          %v1544 = vsub.f32 %v1522, %v1531
          %v1545 = vadd.f32 %v1543, 1e-05
          %v1546 = vrsqrt.pop %v1545
          %v1547 = vmul.f32 %v1544, %v1546
          %v1548 = vadd.f32 %v1547, 0.0001
          %v1549 = vld [vmem:[%s5] sm:$0xff]
          %v1550 = vld [vmem:[%s5 + $0x8] sm:$0xff]
          %v1551 = vld [vmem:[%s5 + $0x10] sm:$0xff]
          %v1552 = vld [vmem:[%s5 + $0x18] sm:$0xff]
          %v1553 = vld [vmem:[%s5 + $0x20] sm:$0xff]
          %v1554 = vld [vmem:[%s5 + $0x28] sm:$0xff]
          %v1555 = vld [vmem:[%s5 + $0x30] sm:$0xff]
          %v1556 = vld [vmem:[%s5 + $0x38] sm:$0xff]
          %v1557 = vld [vmem:[%s5 + $0x40] sm:$0xff]
          %v1558 = vld [vmem:[%s5 + $0x48] sm:$0xff]
          %v1559 = vld [vmem:[%s5 + $0x50] sm:$0xff]
          %v1560 = vld [vmem:[%s5 + $0x58] sm:$0xff]
          %v1561 = vld [vmem:[%s5 + $0x60] sm:$0xff]
          %v1562 = vld [vmem:[%s5 + $0x68] sm:$0xff]
          %v1563 = vld [vmem:[%s5 + $0x70] sm:$0xff]
          %v1564 = vld [vmem:[%s5 + $0x78] sm:$0xff]
          %v1565 = vld [vmem:[%s6] sm:$0x1]
          %v1567 = vlaneseq
          %v1568 = vshrl.u32 %v1567, 7
          %v1569 = vsub.s32 0, %v1568
          %v1570 = vrot.slane %v1565, %v1569
          %1572 = vmatprep.subr.mxu0 0.0
          %1573 = vmatpush1.msra.mxu0 %v1549
          %1574 = vmatprep.subr.mxu0 0.0
          %1575 = vmatpush1.msra.mxu0 %v1550
          %1576 = vmatprep.subr.mxu0 0.0
          %1577 = vmatpush1.msra.mxu0 %v1551
          %1578 = vmatprep.subr.mxu0 0.0
          %1579 = vmatpush1.msra.mxu0 %v1552
          %1580 = vmatprep.subr.mxu0 0.0
          %1581 = vmatpush1.msra.mxu0 %v1553
          %1582 = vmatprep.subr.mxu0 0.0
          %1583 = vmatpush1.msra.mxu0 %v1554
          %1584 = vmatprep.subr.mxu0 0.0
          %1585 = vmatpush1.msra.mxu0 %v1555
          %1586 = vmatprep.subr.mxu0 0.0
          %1587 = vmatpush1.msra.mxu0 %v1556
          %1588 = vmatprep.subr.mxu0 0.0
          %1589 = vmatpush1.msra.mxu0 %v1557
          %1590 = vmatprep.subr.mxu0 0.0
          %1591 = vmatpush1.msra.mxu0 %v1558
          %1592 = vmatprep.subr.mxu0 0.0
          %1593 = vmatpush1.msra.mxu0 %v1559
          %1594 = vmatprep.subr.mxu0 0.0
          %1595 = vmatpush1.msra.mxu0 %v1560
          %1596 = vmatprep.subr.mxu0 0.0
          %1597 = vmatpush1.msra.mxu0 %v1561
          %1598 = vmatprep.subr.mxu0 0.0
          %1599 = vmatpush1.msra.mxu0 %v1562
          %1600 = vmatprep.subr.mxu0 0.0
          %1601 = vmatpush1.msra.mxu0 %v1563
          %1602 = vmatprep.subr.mxu0 0.0
          %1603 = vmatpush1.msra.mxu0 %v1564
          %1604 = vmatprep.subr.mxu0 0.0
          %1605 = vmatpush1.msra.mxu0 0.0
          %1606 = vmatprep.subr.mxu0 0.0
          %1607 = vmatpush1.msra.mxu0 0.0
          %1608 = vmatprep.subr.mxu0 0.0
          %1609 = vmatpush1.msra.mxu0 0.0
          %1610 = vmatprep.subr.mxu0 0.0
          %1611 = vmatpush1.msra.mxu0 0.0
          %1612 = vmatprep.subr.mxu0 0.0
          %1613 = vmatpush1.msra.mxu0 0.0
          %1614 = vmatprep.subr.mxu0 0.0
          %1615 = vmatpush1.msra.mxu0 0.0
          %1616 = vmatprep.subr.mxu0 0.0
          %1617 = vmatpush1.msra.mxu0 0.0
          %1618 = vmatprep.subr.mxu0 0.0
          %1619 = vmatpush1.msra.mxu0 0.0
          %1620 = vmatprep.subr.mxu0 0.0
          %1621 = vmatpush1.msra.mxu0 0.0
          %1622 = vmatprep.subr.mxu0 0.0
          %1623 = vmatpush1.msra.mxu0 0.0
          %1624 = vmatprep.subr.mxu0 0.0
          %1625 = vmatpush1.msra.mxu0 0.0
          %1626 = vmatprep.subr.mxu0 0.0
          %1627 = vmatpush1.msra.mxu0 0.0
          %1628 = vmatprep.subr.mxu0 0.0
          %1629 = vmatpush1.msra.mxu0 0.0
          %1630 = vmatprep.subr.mxu0 0.0
          %1631 = vmatpush1.msra.mxu0 0.0
          %1632 = vmatprep.subr.mxu0 0.0
          %1633 = vmatpush1.msra.mxu0 0.0
          %1634 = vmatprep.subr.mxu0 0.0
          %1635 = vmatpush1.msra.mxu0 0.0
          %1636 = vmatprep.mubr.f32.mxu0 0.0
          %1637 = vmatmul.mubr.f32.gmra.mrb[0].mxu0 %v1548
          %v1638 = vpop.f32.mrb[0].mxu0
          %v1639 = vadd.f32 %v1570, %v1638
          %v1640 = vpop.f32.mrb[0].mxu0
          %1641 = vdwg.mxu0
          %v1642 = vmax.f32 %v1639, 0.0
          %v1643 = vsel %vm1523, %v1642, 0.0
          %v1644 = vrot.slane %v1643, 4
          %v1645 = vadd.f32 %v1643, %v1644
          %v1646 = vrot.slane %v1645, 2
          %v1647 = vadd.f32 %v1645, %v1646
          %v1648 = vrot.slane %v1647, 1
          %v1649 = vadd.f32 %v1647, %v1648
          %v1650 = vmul.f32 %v1649, 0.5
          %v1651 = vmul.f32 %v1642, %v1642
          %v1652 = vsel %vm1523, %v1651, 0.0
          %v1653 = vrot.slane %v1652, 4
          %v1654 = vadd.f32 %v1652, %v1653
          %v1655 = vrot.slane %v1654, 2
          %v1656 = vadd.f32 %v1654, %v1655
          %v1657 = vrot.slane %v1656, 1
          %v1658 = vadd.f32 %v1656, %v1657
          %v1659 = vmul.f32 %v1658, 0.5
          %v1660 = vmul.f32 %v1650, %v1650
          %v1661 = vsub.f32 %v1659, %v1660
          %v1662 = vmax.f32 %v1661, 0.0
          %v1663 = vsub.f32 %v1642, %v1650
          %v1664 = vadd.f32 %v1662, 1e-05
          %v1665 = vrsqrt.pop %v1664
          %v1666 = vmul.f32 %v1663, %v1665
          %v1667 = vadd.f32 %v1666, 0.0001
          %v1668 = vld [vmem:[%s7] sm:$0xff]
          %v1669 = vld [vmem:[%s7 + $0x8] sm:$0xff]
          %v1670 = vld [vmem:[%s7 + $0x10] sm:$0xff]
          %v1671 = vld [vmem:[%s7 + $0x18] sm:$0xff]
          %v1672 = vld [vmem:[%s7 + $0x20] sm:$0xff]
          %v1673 = vld [vmem:[%s7 + $0x28] sm:$0xff]
          %v1674 = vld [vmem:[%s7 + $0x30] sm:$0xff]
          %v1675 = vld [vmem:[%s7 + $0x38] sm:$0xff]
          %v1676 = vld [vmem:[%s7 + $0x40] sm:$0xff]
          %v1677 = vld [vmem:[%s7 + $0x48] sm:$0xff]
          %v1678 = vld [vmem:[%s7 + $0x50] sm:$0xff]
          %v1679 = vld [vmem:[%s7 + $0x58] sm:$0xff]
          %v1680 = vld [vmem:[%s7 + $0x60] sm:$0xff]
          %v1681 = vld [vmem:[%s7 + $0x68] sm:$0xff]
          %v1682 = vld [vmem:[%s7 + $0x70] sm:$0xff]
          %v1683 = vld [vmem:[%s7 + $0x78] sm:$0xff]
          %v1684 = vld [vmem:[%s8] sm:$0x1]
          %v1686 = vlaneseq
          %v1687 = vshrl.u32 %v1686, 7
          %v1688 = vsub.s32 0, %v1687
          %v1689 = vrot.slane %v1684, %v1688
          %1691 = vmatprep.subr.mxu0 0.0
          %1692 = vmatpush1.msra.mxu0 %v1668
          %1693 = vmatprep.subr.mxu0 0.0
          %1694 = vmatpush1.msra.mxu0 %v1669
          %1695 = vmatprep.subr.mxu0 0.0
          %1696 = vmatpush1.msra.mxu0 %v1670
          %1697 = vmatprep.subr.mxu0 0.0
          %1698 = vmatpush1.msra.mxu0 %v1671
          %1699 = vmatprep.subr.mxu0 0.0
          %1700 = vmatpush1.msra.mxu0 %v1672
          %1701 = vmatprep.subr.mxu0 0.0
          %1702 = vmatpush1.msra.mxu0 %v1673
          %1703 = vmatprep.subr.mxu0 0.0
          %1704 = vmatpush1.msra.mxu0 %v1674
          %1705 = vmatprep.subr.mxu0 0.0
          %1706 = vmatpush1.msra.mxu0 %v1675
          %1707 = vmatprep.subr.mxu0 0.0
          %1708 = vmatpush1.msra.mxu0 %v1676
          %1709 = vmatprep.subr.mxu0 0.0
          %1710 = vmatpush1.msra.mxu0 %v1677
          %1711 = vmatprep.subr.mxu0 0.0
          %1712 = vmatpush1.msra.mxu0 %v1678
          %1713 = vmatprep.subr.mxu0 0.0
          %1714 = vmatpush1.msra.mxu0 %v1679
          %1715 = vmatprep.subr.mxu0 0.0
          %1716 = vmatpush1.msra.mxu0 %v1680
          %1717 = vmatprep.subr.mxu0 0.0
          %1718 = vmatpush1.msra.mxu0 %v1681
          %1719 = vmatprep.subr.mxu0 0.0
          %1720 = vmatpush1.msra.mxu0 %v1682
          %1721 = vmatprep.subr.mxu0 0.0
          %1722 = vmatpush1.msra.mxu0 %v1683
          %1723 = vmatprep.subr.mxu0 0.0
          %1724 = vmatpush1.msra.mxu0 0.0
          %1725 = vmatprep.subr.mxu0 0.0
          %1726 = vmatpush1.msra.mxu0 0.0
          %1727 = vmatprep.subr.mxu0 0.0
          %1728 = vmatpush1.msra.mxu0 0.0
          %1729 = vmatprep.subr.mxu0 0.0
          %1730 = vmatpush1.msra.mxu0 0.0
          %1731 = vmatprep.subr.mxu0 0.0
          %1732 = vmatpush1.msra.mxu0 0.0
          %1733 = vmatprep.subr.mxu0 0.0
          %1734 = vmatpush1.msra.mxu0 0.0
          %1735 = vmatprep.subr.mxu0 0.0
          %1736 = vmatpush1.msra.mxu0 0.0
          %1737 = vmatprep.subr.mxu0 0.0
          %1738 = vmatpush1.msra.mxu0 0.0
          %1739 = vmatprep.subr.mxu0 0.0
          %1740 = vmatpush1.msra.mxu0 0.0
          %1741 = vmatprep.subr.mxu0 0.0
          %1742 = vmatpush1.msra.mxu0 0.0
          %1743 = vmatprep.subr.mxu0 0.0
          %1744 = vmatpush1.msra.mxu0 0.0
          %1745 = vmatprep.subr.mxu0 0.0
          %1746 = vmatpush1.msra.mxu0 0.0
          %1747 = vmatprep.subr.mxu0 0.0
          %1748 = vmatpush1.msra.mxu0 0.0
          %1749 = vmatprep.subr.mxu0 0.0
          %1750 = vmatpush1.msra.mxu0 0.0
          %1751 = vmatprep.subr.mxu0 0.0
          %1752 = vmatpush1.msra.mxu0 0.0
          %1753 = vmatprep.subr.mxu0 0.0
          %1754 = vmatpush1.msra.mxu0 0.0
          %1755 = vmatprep.mubr.f32.mxu0 0.0
          %1756 = vmatmul.mubr.f32.gmra.mrb[0].mxu0 %v1667
          %v1757 = vpop.f32.mrb[0].mxu0
          %v1758 = vadd.f32 %v1689, %v1757
          %v1759 = vpop.f32.mrb[0].mxu0
          %1760 = vdwg.mxu0
          %v1761 = vlaneseq
          %v1762 = vand.u32 %v1761, 127
          %vm1763 = vcmp.lt.s32.totalorder %v1762, 4
          %v1764 = vsel %vm1763, %v1758, -1e+30
          %v1765 = vsel %vm1523, %v1764, -inf
          %1766 = vmax.xlane.f32.xlu0 %v1765
          %v1767 = vpop.xlane.xlu0 %1766
          %v1768 = vsub.f32 %v1764, %v1767
          %v1769 = vmul.f32 %v1768, 1.442695
          %v1770 = vpow.pop %v1769
          %v1771 = vsel %vm1523, %v1770, 0.0
          %1772 = vadd.xlane.f32.xlu0 %v1771
          %v1773 = vpop.xlane.xlu0 %1772
          %v1774 = vlog2.pop %v1773
          %v1775 = vmul.f32 %v1774, 0.6931472
          %v1776 = vsub.f32 %v1768, %v1775
          %1777 = vst [vmem:[#allocation8] sm:$0x3] %v1776
        $region92: #{resgcn_forward.1} parent=55 // pred_fallthru
          _
        // Predicated region
        $region93: #{resgcn_forward.1} parent=55 // pred_check
          %p1778 = pneg %p279
        $region94: #{resgcn_forward.1} parent=55 // pred_check_branch
          %1780 = sbr.rel (%p1778) target = $region96
        $region95: #{resgcn_forward.1} parent=55 // pred_region
          %s1782 = ssub.s32 32, 32
          %1783 = vsyncadd [#allocation9], %s1782
          %s1785 = sshll.u32 [#allocation8], 4
          %s1786 = int_to_ptr.vmem [resolvable:$true] %s1785
          %1788 = dma.vmem_to_hbm [thread:$0]  %s1786, 32, %s9, [#allocation9]
        $region96: #{resgcn_forward.1} parent=55 // pred_fallthru
          _
        // Predicated region
        $region97: #{resgcn_forward.1} parent=55 // pred_check
          %p1789 = pneg %p279
        $region98: #{resgcn_forward.1} parent=55 // pred_check_branch
          %1791 = sbr.rel (%p1789) target = $region100
        $region99: #{resgcn_forward.1} parent=55 // pred_region
          %1792 = dma.done [#allocation9], 32
        $region100: #{resgcn_forward.1} parent=55 // pred_fallthru
          _
      $region56: #{resgcn_forward.1} parent=5 // pred_fallthru
        _
      %p1793 = scmp.le.s32.totalorder 2, %s16
      // Predicated region
      $region101: #{resgcn_forward.1} parent=5 // pred_check
        %p1794 = pneg %p1793
      $region102: #{resgcn_forward.1} parent=5 // pred_check_branch
        %1796 = sbr.rel (%p1794) target = $region104
      $region103: #{resgcn_forward.1} parent=5 // pred_region
        %s1797 = ssub.s32 %s16, 2
      $region104: #{resgcn_forward.1} parent=5 // pred_fallthru
        _
    $region6: #{resgcn_forward.1} parent=1 // loop_footer
      %s20 = sadd.s32 1, %s16
    $region7: #{resgcn_forward.1} parent=1 // loop_footer_branch
      %15 = sbr.rel target = $region3
    $region8: #{resgcn_forward.1} parent=1 // loop_exit
      _
    %1798 = vsyncpa [#allocation9], 1
    %s1799 = scalar_lea.sflag [#allocation9], 1
    %1800 = vsyncpa %s1799, 1

</llo_original>
